<compile_context>
chip_gen: v7x
topology: tpu7x:2x2x1
jax: 0.10.0
libtpu: 0.0.40
codegen_flags: <defaults>
</compile_context>

<pallas_src>
import math
import functools

import jax
import jax.numpy as jnp
from jax.experimental import pallas as pl
from jax.experimental.pallas import tpu as pltpu


# TODO(synk): train-mode dropout (stochastic masking) and src_mask support are not
# implemented; this kernel reproduces the eval-mode forward with mask=None.


def _encoder_layer_kernel(x_ref, wqkv_ref, bqkv_ref, wo_ref, bo_ref,
                          g1_ref, be1_ref, w1_ref, bf1_ref,
                          w2_ref, bf2_ref, g2_ref, be2_ref,
                          o_ref, *, n_head, seq_len, eps, approx_recip):
    """Processes one row-block: bb batch samples x seq_len rows of d_model features."""
    f32 = jnp.float32
    bf16 = jnp.bfloat16

    x = x_ref[...]                               # (R, D) f32, R = bb * seq_len
    R, D = x.shape
    S = seq_len
    bb = R // S
    H = n_head
    hd = D // H
    scale = 1.0 / math.sqrt(hd)

    # ---- fused Q/K/V projection: one lane-dense matmul (K = D, N = 3D) --------
    qkv = jnp.dot(x.astype(bf16), wqkv_ref[...],
                  preferred_element_type=f32) + bqkv_ref[...]        # (R, 3D) f32
    q = qkv[:, 0 * D:1 * D].astype(bf16)
    k = qkv[:, 1 * D:2 * D].astype(bf16)
    v = qkv[:, 2 * D:3 * D].astype(bf16)

    # ---- scaled dot-product attention ------------------------------------------
    # Attention must not mix rows of different samples: static loop over the
    # (<= 2 by construction) samples in this block. Within a sample, the
    # score / P@V matmuls are inherently per-head (K = head_dim); an unrolled
    # loop over heads with 2-D lane slices avoids any (S, H, hd) relayout.
    ctx_blocks = []
    for b in range(bb):
        r0 = b * S
        head_ctx = []
        for h in range(H):
            c0 = h * hd
            qh = q[r0:r0 + S, c0:c0 + hd]                            # (S, hd) bf16
            kh = k[r0:r0 + S, c0:c0 + hd]
            vh = v[r0:r0 + S, c0:c0 + hd]
            s = jnp.einsum('qe,ke->qk', qh, kh,
                           preferred_element_type=f32) * scale       # (S, S) f32
            s = s - jnp.max(s, axis=-1, keepdims=True)
            p = jnp.exp(s)
            denom = jnp.sum(p, axis=-1, keepdims=True)
            if approx_recip:
                p = p * pl.reciprocal(denom, approx=True)            # EUP, free slot
            else:
                p = p / denom
            head_ctx.append(jnp.dot(p.astype(bf16), vh,
                                    preferred_element_type=f32))     # (S, hd) f32
        ctx_blocks.append(jnp.concatenate(head_ctx, axis=-1))        # (S, D) f32
    ctx = ctx_blocks[0] if bb == 1 else jnp.concatenate(ctx_blocks, axis=0)  # (R, D)

    # ---- output projection: one (R, D) @ (D, D) matmul (K = D) ----------------
    att = jnp.dot(ctx.astype(bf16), wo_ref[...],
                  preferred_element_type=f32) + bo_ref[...]          # (R, D) f32

    # ---- residual + LayerNorm1 (dropout1 = identity in eval) ------------------
    y = x + att
    mu = jnp.mean(y, axis=-1, keepdims=True)
    var = jnp.mean((y - mu) ** 2, axis=-1, keepdims=True)
    y = (y - mu) * jax.lax.rsqrt(var + eps) * g1_ref[...] + be1_ref[...]

    # ---- position-wise feed-forward (bf16 MXU operands, f32 accumulation) -----
    hid = jnp.dot(y.astype(bf16), w1_ref[...],
                  preferred_element_type=f32) + bf1_ref[...]
    hid = jnp.maximum(hid, 0.0)
    f = jnp.dot(hid.astype(bf16), w2_ref[...],
                preferred_element_type=f32) + bf2_ref[...]

    # ---- residual + LayerNorm2 (dropout2 = identity in eval) ------------------
    z = y + f
    mu2 = jnp.mean(z, axis=-1, keepdims=True)
    var2 = jnp.mean((z - mu2) ** 2, axis=-1, keepdims=True)
    z = (z - mu2) * jax.lax.rsqrt(var2 + eps) * g2_ref[...] + be2_ref[...]

    o_ref[...] = z.astype(o_ref.dtype)


def prepare_params(params, *, matmul_dtype=jnp.bfloat16):
    """One-time (parameter-load-time) weight packing + bf16 pre-cast.

    Hoisted out of the per-call path so the concat/cast is not re-executed on
    every forward. Column layout of wqkv is [Wq | Wk | Wv]; within each segment
    the natural nn.Linear column order already matches the (H, hd) head split.
    """
    (wq, bq, wk, bk, wv, bv, wo, bo,
     g1, be1, w1, bf1, w2, bf2, g2, be2) = params
    wqkv = jnp.concatenate([wq, wk, wv], axis=1).astype(matmul_dtype)   # (D, 3D)
    bqkv = jnp.concatenate([bq, bk, bv], axis=1)                        # (1, 3D) f32
    return [wqkv, bqkv,
            wo.astype(matmul_dtype), bo,
            g1, be1,
            w1.astype(matmul_dtype), bf1,
            w2.astype(matmul_dtype), bf2,
            g2, be2]


def _samples_per_block(batch, seq, target_rows=256):
    """Choose samples per grid step: aim for ~target_rows rows (MXU-friendly M at
    realistic sizes) but keep >= 2 grid steps whenever batch >= 2, so the row
    axis gives BlockSpec double-buffering / dual-TC sharding something to do."""
    bb = max(1, min(batch, target_rows // max(seq, 1)))
    while bb > 1 and batch // bb < 2:
        bb -= 1
    while batch % bb != 0:
        bb -= 1
    return bb


def encoder_layer_pallas(x, prepared_params, *, n_head, eps=1e-5,
                         samples_per_block=None, approx_softmax_recip=True):
    """x: (B, S, D) float32; prepared_params: output of prepare_params()."""
    (wqkv, bqkv, wo, bo, g1, be1, w1, bf1, w2, bf2, g2, be2) = prepared_params
    B, S, D = x.shape
    F = w1.shape[1]
    assert D % n_head == 0

    if samples_per_block is None:
        samples_per_block = _samples_per_block(B, S)
    assert B % samples_per_block == 0
    bb = samples_per_block
    num_blocks = B // bb
    rows = bb * S                       # rows (tokens) per grid step

    x2d = x.reshape(B * S, D)
    weights = [wqkv, bqkv, wo, bo, g1, be1, w1, bf1, w2, bf2, g2, be2]

    def full_spec(w):                   # fully-resident weight (constant index_map)
        return pl.BlockSpec(w.shape, lambda i, _nd=w.ndim: (0,) * _nd)

    in_specs = [pl.BlockSpec((rows, D), lambda i: (i, 0))]
    in_specs += [full_spec(w) for w in weights]

    kernel = functools.partial(_encoder_layer_kernel, n_head=n_head,
                               seq_len=S, eps=eps,
                               approx_recip=approx_softmax_recip)

    # Advisory cost estimate. Weights use a constant index_map, so they are
    # DMA'd once (not once per block).
    flops = int(2 * B * S * (4 * D * D + 2 * S * D + 2 * D * F))
    transcendentals = int(B * n_head * S * S)
    weight_bytes = sum(int(w.size) * w.dtype.itemsize for w in weights)
    bytes_accessed = int(2 * B * S * D * x.dtype.itemsize + weight_bytes)
    cost = pl.CostEstimate(flops=flops, transcendentals=transcendentals,
                           bytes_accessed=bytes_accessed)

    # Explicit scoped-VMEM budget: resident weights + double-buffered x/out
    # blocks, with headroom; clamped to a range that is safe on v5e/v6e/v7x.
    block_io_bytes = 2 * rows * D * x.dtype.itemsize
    resident_bytes = weight_bytes + 2 * block_io_bytes
    vmem_limit = int(max(16 << 20, min(2 * resident_bytes + (2 << 20), 48 << 20)))

    out2d = pl.pallas_call(
        kernel,
        out_shape=jax.ShapeDtypeStruct((B * S, D), x.dtype),
        grid_spec=pltpu.PrefetchScalarGridSpec(
            num_scalar_prefetch=0,
            grid=(num_blocks,),
            in_specs=in_specs,
            out_specs=pl.BlockSpec((rows, D), lambda i: (i, 0)),
        ),
        compiler_params=pltpu.CompilerParams(
            dimension_semantics=("parallel",),
            vmem_limit_bytes=vmem_limit),
        cost_estimate=cost,
    )(x2d, *weights)

    return out2d.reshape(B, S, D)


def encoder_layer_ref(x, params, *, n_head, eps=1e-5, matmul_dtype=None):
    """Pure-JAX reference. matmul_dtype=jnp.bfloat16 mirrors the kernel's MXU casts."""
    (wq, bq, wk, bk, wv, bv, wo, bo,
     g1, be1, w1, bf1, w2, bf2, g2, be2) = params
    B, S, D = x.shape
    hd = D // n_head
    f32 = jnp.float32
    c = (lambda t: t.astype(matmul_dtype)) if matmul_dtype is not None else (lambda t: t)

    q = jnp.einsum('bsd,de->bse', c(x), c(wq), preferred_element_type=f32) + bq[0]
    k = jnp.einsum('bsd,de->bse', c(x), c(wk), preferred_element_type=f32) + bk[0]
    v = jnp.einsum('bsd,de->bse', c(x), c(wv), preferred_element_type=f32) + bv[0]
    qh = q.reshape(B, S, n_head, hd).transpose(0, 2, 1, 3)
    kh = k.reshape(B, S, n_head, hd).transpose(0, 2, 1, 3)
    vh = v.reshape(B, S, n_head, hd).transpose(0, 2, 1, 3)
    s = jnp.einsum('bhqe,bhke->bhqk', c(qh), c(kh),
                   preferred_element_type=f32) / math.sqrt(hd)
    p = jax.nn.softmax(s, axis=-1)
    ctx = jnp.einsum('bhqk,bhke->bhqe', c(p), c(vh), preferred_element_type=f32)
    ctx = ctx.transpose(0, 2, 1, 3).reshape(B, S, D)
    att = jnp.einsum('bsd,de->bse', c(ctx), c(wo), preferred_element_type=f32) + bo[0]

    def ln(t, g, b):
        mu = jnp.mean(t, -1, keepdims=True)
        var = jnp.mean((t - mu) ** 2, -1, keepdims=True)
        return (t - mu) * jax.lax.rsqrt(var + eps) * g[0] + b[0]

    y = ln(x + att, g1, be1)
    hid = jnp.maximum(
        jnp.einsum('bsd,df->bsf', c(y), c(w1), preferred_element_type=f32) + bf1[0], 0.0)
    f = jnp.einsum('bsf,fd->bsd', c(hid), c(w2), preferred_element_type=f32) + bf2[0]
    return ln(y + f, g2, be2)


def init_params(key, d_model, ffn_hidden):
    """Deterministic synthetic parameters. Linear weights stored as (in, out)."""
    ks = jax.random.split(key, 8)
    scale = 0.02
    wq = scale * jax.random.normal(ks[0], (d_model, d_model), jnp.float32)
    wk = scale * jax.random.normal(ks[1], (d_model, d_model), jnp.float32)
    wv = scale * jax.random.normal(ks[2], (d_model, d_model), jnp.float32)
    wo = scale * jax.random.normal(ks[3], (d_model, d_model), jnp.float32)
    w1 = scale * jax.random.normal(ks[4], (d_model, ffn_hidden), jnp.float32)
    w2 = scale * jax.random.normal(ks[5], (ffn_hidden, d_model), jnp.float32)
    bq = 0.01 * jax.random.normal(ks[6], (1, d_model), jnp.float32)
    bk = jnp.zeros((1, d_model), jnp.float32)
    bv = jnp.zeros((1, d_model), jnp.float32)
    bo = 0.01 * jax.random.normal(ks[7], (1, d_model), jnp.float32)
    bf1 = jnp.zeros((1, ffn_hidden), jnp.float32)
    bf2 = jnp.zeros((1, d_model), jnp.float32)
    g1 = jnp.ones((1, d_model), jnp.float32)
    be1 = jnp.zeros((1, d_model), jnp.float32)
    g2 = jnp.ones((1, d_model), jnp.float32)
    be2 = jnp.zeros((1, d_model), jnp.float32)
    return [wq, bq, wk, bk, wv, bv, wo, bo,
            g1, be1, w1, bf1, w2, bf2, g2, be2]


if __name__ == "__main__":
    B, S, D = 2, 8, 32          # batch, seq, d_model
    n_head = 4
    ffn_hidden = 64

    key = jax.random.PRNGKey(0)
    kx, kp = jax.random.split(key)
    x = jax.random.normal(kx, (B, S, D), jnp.float32)
    params = init_params(kp, D, ffn_hidden)

    # Weight packing / bf16 pre-cast done once, outside the per-call path.
    prepared = prepare_params(params)
    prepared = jax.block_until_ready(prepared)

    out = encoder_layer_pallas(x, prepared, n_head=n_head)
    out = jax.block_until_ready(out)
    assert out.shape == (B, S, D)

    # Tight check vs a reference that mirrors the kernel's bf16 MXU operand casts.
    ref_bf16 = encoder_layer_ref(x, params, n_head=n_head, matmul_dtype=jnp.bfloat16)
    assert jnp.allclose(out, ref_bf16, atol=5e-3, rtol=5e-3), "mismatch vs bf16 reference"

    # Loose check vs the full-precision (original-module) reference.
    ref_f32 = encoder_layer_ref(x, params, n_head=n_head)
    assert jnp.allclose(out, ref_f32, atol=2e-2, rtol=2e-2), "mismatch vs f32 reference"

    print("KERNEL_OK")
</pallas_src>

<mosaic_0001>
module attributes {stable_mosaic.version = 11 : i64} {
  func.func @_encoder_layer_kernel(%arg0: i32, %arg1: memref<8x32xf32, #tpu.memory_space<vmem>>, %arg2: memref<32x96xbf16, #tpu.memory_space<vmem>>, %arg3: memref<1x96xf32, #tpu.memory_space<vmem>>, %arg4: memref<32x32xbf16, #tpu.memory_space<vmem>>, %arg5: memref<1x32xf32, #tpu.memory_space<vmem>>, %arg6: memref<1x32xf32, #tpu.memory_space<vmem>>, %arg7: memref<1x32xf32, #tpu.memory_space<vmem>>, %arg8: memref<32x64xbf16, #tpu.memory_space<vmem>>, %arg9: memref<1x64xf32, #tpu.memory_space<vmem>>, %arg10: memref<64x32xbf16, #tpu.memory_space<vmem>>, %arg11: memref<1x32xf32, #tpu.memory_space<vmem>>, %arg12: memref<1x32xf32, #tpu.memory_space<vmem>>, %arg13: memref<1x32xf32, #tpu.memory_space<vmem>>, %arg14: memref<8x32xf32, #tpu.memory_space<vmem>>) attributes {dimension_semantics = [#tpu.dimension_semantics<parallel>], iteration_bounds = array<i64: 2>, scalar_prefetch = 0 : i64, scratch_operands = 0 : i64, tpu.core_type = #tpu.core_type<tc>, window_params = [{transform_indices = @transform_0, window_bounds = array<i64: 8, 32>}, {pipeline_mode = #tpu.pipeline_mode<synchronous>, transform_indices = @transform_1, window_bounds = array<i64: 32, 96>}, {pipeline_mode = #tpu.pipeline_mode<synchronous>, transform_indices = @transform_2, window_bounds = array<i64: 1, 96>}, {pipeline_mode = #tpu.pipeline_mode<synchronous>, transform_indices = @transform_3, window_bounds = array<i64: 32, 32>}, {pipeline_mode = #tpu.pipeline_mode<synchronous>, transform_indices = @transform_4, window_bounds = array<i64: 1, 32>}, {pipeline_mode = #tpu.pipeline_mode<synchronous>, transform_indices = @transform_5, window_bounds = array<i64: 1, 32>}, {pipeline_mode = #tpu.pipeline_mode<synchronous>, transform_indices = @transform_6, window_bounds = array<i64: 1, 32>}, {pipeline_mode = #tpu.pipeline_mode<synchronous>, transform_indices = @transform_7, window_bounds = array<i64: 32, 64>}, {pipeline_mode = #tpu.pipeline_mode<synchronous>, transform_indices = @transform_8, window_bounds = array<i64: 1, 64>}, {pipeline_mode = #tpu.pipeline_mode<synchronous>, transform_indices = @transform_9, window_bounds = array<i64: 64, 32>}, {pipeline_mode = #tpu.pipeline_mode<synchronous>, transform_indices = @transform_10, window_bounds = array<i64: 1, 32>}, {pipeline_mode = #tpu.pipeline_mode<synchronous>, transform_indices = @transform_11, window_bounds = array<i64: 1, 32>}, {pipeline_mode = #tpu.pipeline_mode<synchronous>, transform_indices = @transform_12, window_bounds = array<i64: 1, 32>}, {transform_indices = @transform_13, window_bounds = array<i64: 8, 32>}]} {
    %c0 = arith.constant 0 : index
    %c0_0 = arith.constant 0 : index
    %0 = vector.load %arg1[%c0, %c0_0] : memref<8x32xf32, #tpu.memory_space<vmem>>, vector<8x32xf32>
    %1 = arith.truncf %0 : vector<8x32xf32> to vector<8x32xbf16>
    %c0_1 = arith.constant 0 : index
    %c0_2 = arith.constant 0 : index
    %2 = vector.load %arg2[%c0_1, %c0_2] : memref<32x96xbf16, #tpu.memory_space<vmem>>, vector<32x96xbf16>
    %cst = arith.constant dense<0.000000e+00> : vector<8x96xf32>
    %3 = tpu.matmul %1, %2, %cst {dimension_numbers = #tpu.dot_dimension_numbers<[1], [0], [0], [1], [0, 0, 1, 1], [], []>} : vector<8x32xbf16>, vector<32x96xbf16>, vector<8x96xf32> -> vector<8x96xf32>
    %c0_3 = arith.constant 0 : index
    %c0_4 = arith.constant 0 : index
    %4 = vector.load %arg3[%c0_3, %c0_4] : memref<1x96xf32, #tpu.memory_space<vmem>>, vector<1x96xf32>
    %5 = vector.broadcast %4 : vector<1x96xf32> to vector<8x96xf32>
    %6 = arith.addf %3, %5 : vector<8x96xf32>
    %7 = vector.extract_strided_slice %6 {offsets = [0, 0], sizes = [8, 32], strides = [1, 1]} : vector<8x96xf32> to vector<8x32xf32>
    %8 = arith.truncf %7 : vector<8x32xf32> to vector<8x32xbf16>
    %9 = vector.extract_strided_slice %6 {offsets = [0, 32], sizes = [8, 32], strides = [1, 1]} : vector<8x96xf32> to vector<8x32xf32>
    %10 = arith.truncf %9 : vector<8x32xf32> to vector<8x32xbf16>
    %11 = vector.extract_strided_slice %6 {offsets = [0, 64], sizes = [8, 32], strides = [1, 1]} : vector<8x96xf32> to vector<8x32xf32>
    %12 = arith.truncf %11 : vector<8x32xf32> to vector<8x32xbf16>
    %13 = vector.extract_strided_slice %8 {offsets = [0, 0], sizes = [8, 8], strides = [1, 1]} : vector<8x32xbf16> to vector<8x8xbf16>
    %14 = vector.extract_strided_slice %10 {offsets = [0, 0], sizes = [8, 8], strides = [1, 1]} : vector<8x32xbf16> to vector<8x8xbf16>
    %15 = vector.extract_strided_slice %12 {offsets = [0, 0], sizes = [8, 8], strides = [1, 1]} : vector<8x32xbf16> to vector<8x8xbf16>
    "tpu.trace_start"() <{level = 10 : i32, message = "qe,ke->qk"}> : () -> ()
    %cst_5 = arith.constant dense<0.000000e+00> : vector<8x8xf32>
    %16 = tpu.matmul %13, %14, %cst_5 {dimension_numbers = #tpu.dot_dimension_numbers<[1], [1], [0], [0], [0, 0, 1, 0], [], []>} : vector<8x8xbf16>, vector<8x8xbf16>, vector<8x8xf32> -> vector<8x8xf32>
    "tpu.trace_stop"() : () -> ()
    %cst_6 = arith.constant 0.353553385 : f32
    %17 = vector.broadcast %cst_6 : f32 to vector<8x8xf32>
    %18 = arith.mulf %16, %17 : vector<8x8xf32>
    %cst_7 = arith.constant dense<0xFF800000> : vector<8xf32>
    %19 = vector.multi_reduction <maximumf>, %18, %cst_7 [1] : vector<8x8xf32> to vector<8xf32>
    %20 = vector.shape_cast %19 : vector<8xf32> to vector<8x1xf32>
    %21 = vector.broadcast %20 : vector<8x1xf32> to vector<8x8xf32>
    %22 = arith.subf %18, %21 : vector<8x8xf32>
    %23 = math.exp %22 : vector<8x8xf32>
    %cst_8 = arith.constant dense<0.000000e+00> : vector<8xf32>
    %24 = vector.multi_reduction <add>, %23, %cst_8 [1] : vector<8x8xf32> to vector<8xf32>
    %25 = vector.shape_cast %24 : vector<8xf32> to vector<8x1xf32>
    %26 = tpu.reciprocal %25 {approx = true} : vector<8x1xf32> -> vector<8x1xf32>
    %27 = vector.broadcast %26 : vector<8x1xf32> to vector<8x8xf32>
    %28 = arith.mulf %23, %27 : vector<8x8xf32>
    %29 = arith.truncf %28 : vector<8x8xf32> to vector<8x8xbf16>
    %cst_9 = arith.constant dense<0.000000e+00> : vector<8x8xf32>
    %30 = tpu.matmul %29, %15, %cst_9 {dimension_numbers = #tpu.dot_dimension_numbers<[1], [0], [0], [1], [0, 0, 1, 1], [], []>} : vector<8x8xbf16>, vector<8x8xbf16>, vector<8x8xf32> -> vector<8x8xf32>
    %31 = vector.extract_strided_slice %8 {offsets = [0, 8], sizes = [8, 8], strides = [1, 1]} : vector<8x32xbf16> to vector<8x8xbf16>
    %32 = vector.extract_strided_slice %10 {offsets = [0, 8], sizes = [8, 8], strides = [1, 1]} : vector<8x32xbf16> to vector<8x8xbf16>
    %33 = vector.extract_strided_slice %12 {offsets = [0, 8], sizes = [8, 8], strides = [1, 1]} : vector<8x32xbf16> to vector<8x8xbf16>
    "tpu.trace_start"() <{level = 10 : i32, message = "qe,ke->qk"}> : () -> ()
    %cst_10 = arith.constant dense<0.000000e+00> : vector<8x8xf32>
    %34 = tpu.matmul %31, %32, %cst_10 {dimension_numbers = #tpu.dot_dimension_numbers<[1], [1], [0], [0], [0, 0, 1, 0], [], []>} : vector<8x8xbf16>, vector<8x8xbf16>, vector<8x8xf32> -> vector<8x8xf32>
    "tpu.trace_stop"() : () -> ()
    %cst_11 = arith.constant 0.353553385 : f32
    %35 = vector.broadcast %cst_11 : f32 to vector<8x8xf32>
    %36 = arith.mulf %34, %35 : vector<8x8xf32>
    %cst_12 = arith.constant dense<0xFF800000> : vector<8xf32>
    %37 = vector.multi_reduction <maximumf>, %36, %cst_12 [1] : vector<8x8xf32> to vector<8xf32>
    %38 = vector.shape_cast %37 : vector<8xf32> to vector<8x1xf32>
    %39 = vector.broadcast %38 : vector<8x1xf32> to vector<8x8xf32>
    %40 = arith.subf %36, %39 : vector<8x8xf32>
    %41 = math.exp %40 : vector<8x8xf32>
    %cst_13 = arith.constant dense<0.000000e+00> : vector<8xf32>
    %42 = vector.multi_reduction <add>, %41, %cst_13 [1] : vector<8x8xf32> to vector<8xf32>
    %43 = vector.shape_cast %42 : vector<8xf32> to vector<8x1xf32>
    %44 = tpu.reciprocal %43 {approx = true} : vector<8x1xf32> -> vector<8x1xf32>
    %45 = vector.broadcast %44 : vector<8x1xf32> to vector<8x8xf32>
    %46 = arith.mulf %41, %45 : vector<8x8xf32>
    %47 = arith.truncf %46 : vector<8x8xf32> to vector<8x8xbf16>
    %cst_14 = arith.constant dense<0.000000e+00> : vector<8x8xf32>
    %48 = tpu.matmul %47, %33, %cst_14 {dimension_numbers = #tpu.dot_dimension_numbers<[1], [0], [0], [1], [0, 0, 1, 1], [], []>} : vector<8x8xbf16>, vector<8x8xbf16>, vector<8x8xf32> -> vector<8x8xf32>
    %49 = vector.extract_strided_slice %8 {offsets = [0, 16], sizes = [8, 8], strides = [1, 1]} : vector<8x32xbf16> to vector<8x8xbf16>
    %50 = vector.extract_strided_slice %10 {offsets = [0, 16], sizes = [8, 8], strides = [1, 1]} : vector<8x32xbf16> to vector<8x8xbf16>
    %51 = vector.extract_strided_slice %12 {offsets = [0, 16], sizes = [8, 8], strides = [1, 1]} : vector<8x32xbf16> to vector<8x8xbf16>
    "tpu.trace_start"() <{level = 10 : i32, message = "qe,ke->qk"}> : () -> ()
    %cst_15 = arith.constant dense<0.000000e+00> : vector<8x8xf32>
    %52 = tpu.matmul %49, %50, %cst_15 {dimension_numbers = #tpu.dot_dimension_numbers<[1], [1], [0], [0], [0, 0, 1, 0], [], []>} : vector<8x8xbf16>, vector<8x8xbf16>, vector<8x8xf32> -> vector<8x8xf32>
    "tpu.trace_stop"() : () -> ()
    %cst_16 = arith.constant 0.353553385 : f32
    %53 = vector.broadcast %cst_16 : f32 to vector<8x8xf32>
    %54 = arith.mulf %52, %53 : vector<8x8xf32>
    %cst_17 = arith.constant dense<0xFF800000> : vector<8xf32>
    %55 = vector.multi_reduction <maximumf>, %54, %cst_17 [1] : vector<8x8xf32> to vector<8xf32>
    %56 = vector.shape_cast %55 : vector<8xf32> to vector<8x1xf32>
    %57 = vector.broadcast %56 : vector<8x1xf32> to vector<8x8xf32>
    %58 = arith.subf %54, %57 : vector<8x8xf32>
    %59 = math.exp %58 : vector<8x8xf32>
    %cst_18 = arith.constant dense<0.000000e+00> : vector<8xf32>
    %60 = vector.multi_reduction <add>, %59, %cst_18 [1] : vector<8x8xf32> to vector<8xf32>
    %61 = vector.shape_cast %60 : vector<8xf32> to vector<8x1xf32>
    %62 = tpu.reciprocal %61 {approx = true} : vector<8x1xf32> -> vector<8x1xf32>
    %63 = vector.broadcast %62 : vector<8x1xf32> to vector<8x8xf32>
    %64 = arith.mulf %59, %63 : vector<8x8xf32>
    %65 = arith.truncf %64 : vector<8x8xf32> to vector<8x8xbf16>
    %cst_19 = arith.constant dense<0.000000e+00> : vector<8x8xf32>
    %66 = tpu.matmul %65, %51, %cst_19 {dimension_numbers = #tpu.dot_dimension_numbers<[1], [0], [0], [1], [0, 0, 1, 1], [], []>} : vector<8x8xbf16>, vector<8x8xbf16>, vector<8x8xf32> -> vector<8x8xf32>
    %67 = vector.extract_strided_slice %8 {offsets = [0, 24], sizes = [8, 8], strides = [1, 1]} : vector<8x32xbf16> to vector<8x8xbf16>
    %68 = vector.extract_strided_slice %10 {offsets = [0, 24], sizes = [8, 8], strides = [1, 1]} : vector<8x32xbf16> to vector<8x8xbf16>
    %69 = vector.extract_strided_slice %12 {offsets = [0, 24], sizes = [8, 8], strides = [1, 1]} : vector<8x32xbf16> to vector<8x8xbf16>
    "tpu.trace_start"() <{level = 10 : i32, message = "qe,ke->qk"}> : () -> ()
    %cst_20 = arith.constant dense<0.000000e+00> : vector<8x8xf32>
    %70 = tpu.matmul %67, %68, %cst_20 {dimension_numbers = #tpu.dot_dimension_numbers<[1], [1], [0], [0], [0, 0, 1, 0], [], []>} : vector<8x8xbf16>, vector<8x8xbf16>, vector<8x8xf32> -> vector<8x8xf32>
    "tpu.trace_stop"() : () -> ()
    %cst_21 = arith.constant 0.353553385 : f32
    %71 = vector.broadcast %cst_21 : f32 to vector<8x8xf32>
    %72 = arith.mulf %70, %71 : vector<8x8xf32>
    %cst_22 = arith.constant dense<0xFF800000> : vector<8xf32>
    %73 = vector.multi_reduction <maximumf>, %72, %cst_22 [1] : vector<8x8xf32> to vector<8xf32>
    %74 = vector.shape_cast %73 : vector<8xf32> to vector<8x1xf32>
    %75 = vector.broadcast %74 : vector<8x1xf32> to vector<8x8xf32>
    %76 = arith.subf %72, %75 : vector<8x8xf32>
    %77 = math.exp %76 : vector<8x8xf32>
    %cst_23 = arith.constant dense<0.000000e+00> : vector<8xf32>
    %78 = vector.multi_reduction <add>, %77, %cst_23 [1] : vector<8x8xf32> to vector<8xf32>
    %79 = vector.shape_cast %78 : vector<8xf32> to vector<8x1xf32>
    %80 = tpu.reciprocal %79 {approx = true} : vector<8x1xf32> -> vector<8x1xf32>
    %81 = vector.broadcast %80 : vector<8x1xf32> to vector<8x8xf32>
    %82 = arith.mulf %77, %81 : vector<8x8xf32>
    %83 = arith.truncf %82 : vector<8x8xf32> to vector<8x8xbf16>
    %cst_24 = arith.constant dense<0.000000e+00> : vector<8x8xf32>
    %84 = tpu.matmul %83, %69, %cst_24 {dimension_numbers = #tpu.dot_dimension_numbers<[1], [0], [0], [1], [0, 0, 1, 1], [], []>} : vector<8x8xbf16>, vector<8x8xbf16>, vector<8x8xf32> -> vector<8x8xf32>
    %85 = tpu.concatenate %30, %48, %66, %84 in 1 : vector<8x8xf32>, vector<8x8xf32>, vector<8x8xf32>, vector<8x8xf32> -> vector<8x32xf32>
    %86 = arith.truncf %85 : vector<8x32xf32> to vector<8x32xbf16>
    %c0_25 = arith.constant 0 : index
    %c0_26 = arith.constant 0 : index
    %87 = vector.load %arg4[%c0_25, %c0_26] : memref<32x32xbf16, #tpu.memory_space<vmem>>, vector<32x32xbf16>
    %cst_27 = arith.constant dense<0.000000e+00> : vector<8x32xf32>
    %88 = tpu.matmul %86, %87, %cst_27 {dimension_numbers = #tpu.dot_dimension_numbers<[1], [0], [0], [1], [0, 0, 1, 1], [], []>} : vector<8x32xbf16>, vector<32x32xbf16>, vector<8x32xf32> -> vector<8x32xf32>
    %c0_28 = arith.constant 0 : index
    %c0_29 = arith.constant 0 : index
    %89 = vector.load %arg5[%c0_28, %c0_29] : memref<1x32xf32, #tpu.memory_space<vmem>>, vector<1x32xf32>
    %90 = vector.broadcast %89 : vector<1x32xf32> to vector<8x32xf32>
    %91 = arith.addf %88, %90 : vector<8x32xf32>
    %92 = arith.addf %0, %91 : vector<8x32xf32>
    %cst_30 = arith.constant dense<0.000000e+00> : vector<8xf32>
    %93 = vector.multi_reduction <add>, %92, %cst_30 [1] : vector<8x32xf32> to vector<8xf32>
    %94 = vector.shape_cast %93 : vector<8xf32> to vector<8x1xf32>
    %cst_31 = arith.constant 3.200000e+01 : f32
    %95 = vector.broadcast %cst_31 : f32 to vector<8x1xf32>
    %96 = arith.divf %94, %95 : vector<8x1xf32>
    %97 = vector.broadcast %96 : vector<8x1xf32> to vector<8x32xf32>
    %98 = arith.subf %92, %97 : vector<8x32xf32>
    %99 = arith.mulf %98, %98 : vector<8x32xf32>
    %cst_32 = arith.constant dense<0.000000e+00> : vector<8xf32>
    %100 = vector.multi_reduction <add>, %99, %cst_32 [1] : vector<8x32xf32> to vector<8xf32>
    %101 = vector.shape_cast %100 : vector<8xf32> to vector<8x1xf32>
    %cst_33 = arith.constant 3.200000e+01 : f32
    %102 = vector.broadcast %cst_33 : f32 to vector<8x1xf32>
    %103 = arith.divf %101, %102 : vector<8x1xf32>
    %104 = vector.broadcast %96 : vector<8x1xf32> to vector<8x32xf32>
    %105 = arith.subf %92, %104 : vector<8x32xf32>
    %cst_34 = arith.constant 9.99999974E-6 : f32
    %106 = vector.broadcast %cst_34 : f32 to vector<8x1xf32>
    %107 = arith.addf %103, %106 : vector<8x1xf32>
    %108 = math.rsqrt %107 : vector<8x1xf32>
    %109 = vector.broadcast %108 : vector<8x1xf32> to vector<8x32xf32>
    %110 = arith.mulf %105, %109 : vector<8x32xf32>
    %c0_35 = arith.constant 0 : index
    %c0_36 = arith.constant 0 : index
    %111 = vector.load %arg6[%c0_35, %c0_36] : memref<1x32xf32, #tpu.memory_space<vmem>>, vector<1x32xf32>
    %112 = vector.broadcast %111 : vector<1x32xf32> to vector<8x32xf32>
    %113 = arith.mulf %110, %112 : vector<8x32xf32>
    %c0_37 = arith.constant 0 : index
    %c0_38 = arith.constant 0 : index
    %114 = vector.load %arg7[%c0_37, %c0_38] : memref<1x32xf32, #tpu.memory_space<vmem>>, vector<1x32xf32>
    %115 = vector.broadcast %114 : vector<1x32xf32> to vector<8x32xf32>
    %116 = arith.addf %113, %115 : vector<8x32xf32>
    %117 = arith.truncf %116 : vector<8x32xf32> to vector<8x32xbf16>
    %c0_39 = arith.constant 0 : index
    %c0_40 = arith.constant 0 : index
    %118 = vector.load %arg8[%c0_39, %c0_40] : memref<32x64xbf16, #tpu.memory_space<vmem>>, vector<32x64xbf16>
    %cst_41 = arith.constant dense<0.000000e+00> : vector<8x64xf32>
    %119 = tpu.matmul %117, %118, %cst_41 {dimension_numbers = #tpu.dot_dimension_numbers<[1], [0], [0], [1], [0, 0, 1, 1], [], []>} : vector<8x32xbf16>, vector<32x64xbf16>, vector<8x64xf32> -> vector<8x64xf32>
    %c0_42 = arith.constant 0 : index
    %c0_43 = arith.constant 0 : index
    %120 = vector.load %arg9[%c0_42, %c0_43] : memref<1x64xf32, #tpu.memory_space<vmem>>, vector<1x64xf32>
    %121 = vector.broadcast %120 : vector<1x64xf32> to vector<8x64xf32>
    %122 = arith.addf %119, %121 : vector<8x64xf32>
    %cst_44 = arith.constant 0.000000e+00 : f32
    %123 = vector.broadcast %cst_44 : f32 to vector<8x64xf32>
    %124 = arith.maximumf %122, %123 : vector<8x64xf32>
    %125 = arith.truncf %124 : vector<8x64xf32> to vector<8x64xbf16>
    %c0_45 = arith.constant 0 : index
    %c0_46 = arith.constant 0 : index
    %126 = vector.load %arg10[%c0_45, %c0_46] : memref<64x32xbf16, #tpu.memory_space<vmem>>, vector<64x32xbf16>
    %cst_47 = arith.constant dense<0.000000e+00> : vector<8x32xf32>
    %127 = tpu.matmul %125, %126, %cst_47 {dimension_numbers = #tpu.dot_dimension_numbers<[1], [0], [0], [1], [0, 0, 1, 1], [], []>} : vector<8x64xbf16>, vector<64x32xbf16>, vector<8x32xf32> -> vector<8x32xf32>
    %c0_48 = arith.constant 0 : index
    %c0_49 = arith.constant 0 : index
    %128 = vector.load %arg11[%c0_48, %c0_49] : memref<1x32xf32, #tpu.memory_space<vmem>>, vector<1x32xf32>
    %129 = vector.broadcast %128 : vector<1x32xf32> to vector<8x32xf32>
    %130 = arith.addf %127, %129 : vector<8x32xf32>
    %131 = arith.addf %116, %130 : vector<8x32xf32>
    %cst_50 = arith.constant dense<0.000000e+00> : vector<8xf32>
    %132 = vector.multi_reduction <add>, %131, %cst_50 [1] : vector<8x32xf32> to vector<8xf32>
    %133 = vector.shape_cast %132 : vector<8xf32> to vector<8x1xf32>
    %cst_51 = arith.constant 3.200000e+01 : f32
    %134 = vector.broadcast %cst_51 : f32 to vector<8x1xf32>
    %135 = arith.divf %133, %134 : vector<8x1xf32>
    %136 = vector.broadcast %135 : vector<8x1xf32> to vector<8x32xf32>
    %137 = arith.subf %131, %136 : vector<8x32xf32>
    %138 = arith.mulf %137, %137 : vector<8x32xf32>
    %cst_52 = arith.constant dense<0.000000e+00> : vector<8xf32>
    %139 = vector.multi_reduction <add>, %138, %cst_52 [1] : vector<8x32xf32> to vector<8xf32>
    %140 = vector.shape_cast %139 : vector<8xf32> to vector<8x1xf32>
    %cst_53 = arith.constant 3.200000e+01 : f32
    %141 = vector.broadcast %cst_53 : f32 to vector<8x1xf32>
    %142 = arith.divf %140, %141 : vector<8x1xf32>
    %143 = vector.broadcast %135 : vector<8x1xf32> to vector<8x32xf32>
    %144 = arith.subf %131, %143 : vector<8x32xf32>
    %cst_54 = arith.constant 9.99999974E-6 : f32
    %145 = vector.broadcast %cst_54 : f32 to vector<8x1xf32>
    %146 = arith.addf %142, %145 : vector<8x1xf32>
    %147 = math.rsqrt %146 : vector<8x1xf32>
    %148 = vector.broadcast %147 : vector<8x1xf32> to vector<8x32xf32>
    %149 = arith.mulf %144, %148 : vector<8x32xf32>
    %c0_55 = arith.constant 0 : index
    %c0_56 = arith.constant 0 : index
    %150 = vector.load %arg12[%c0_55, %c0_56] : memref<1x32xf32, #tpu.memory_space<vmem>>, vector<1x32xf32>
    %151 = vector.broadcast %150 : vector<1x32xf32> to vector<8x32xf32>
    %152 = arith.mulf %149, %151 : vector<8x32xf32>
    %c0_57 = arith.constant 0 : index
    %c0_58 = arith.constant 0 : index
    %153 = vector.load %arg13[%c0_57, %c0_58] : memref<1x32xf32, #tpu.memory_space<vmem>>, vector<1x32xf32>
    %154 = vector.broadcast %153 : vector<1x32xf32> to vector<8x32xf32>
    %155 = arith.addf %152, %154 : vector<8x32xf32>
    %c0_59 = arith.constant 0 : index
    %c0_60 = arith.constant 0 : index
    %156 = vector.load %arg14[%c0_59, %c0_60] : memref<8x32xf32, #tpu.memory_space<vmem>>, vector<8x32xf32>
    tpu.vector_store %arg14[%c0_59, %c0_60], %155 {strides = array<i32>} : memref<8x32xf32, #tpu.memory_space<vmem>>, vector<8x32xf32>,
    return
  }
  func.func @transform_0(%arg0: i32) -> (i32, i32) {
    %c0_i32 = arith.constant 0 : i32
    %c0_i32_0 = arith.constant 0 : i32
    return %arg0, %c0_i32 : i32, i32
  }
  func.func @transform_1(%arg0: i32) -> (i32, i32) {
    %c0_i32 = arith.constant 0 : i32
    %c0_i32_0 = arith.constant 0 : i32
    %c0_i32_1 = arith.constant 0 : i32
    return %c0_i32, %c0_i32_0 : i32, i32
  }
  func.func @transform_2(%arg0: i32) -> (i32, i32) {
    %c0_i32 = arith.constant 0 : i32
    %c0_i32_0 = arith.constant 0 : i32
    %c0_i32_1 = arith.constant 0 : i32
    return %c0_i32, %c0_i32_0 : i32, i32
  }
  func.func @transform_3(%arg0: i32) -> (i32, i32) {
    %c0_i32 = arith.constant 0 : i32
    %c0_i32_0 = arith.constant 0 : i32
    %c0_i32_1 = arith.constant 0 : i32
    return %c0_i32, %c0_i32_0 : i32, i32
  }
  func.func @transform_4(%arg0: i32) -> (i32, i32) {
    %c0_i32 = arith.constant 0 : i32
    %c0_i32_0 = arith.constant 0 : i32
    %c0_i32_1 = arith.constant 0 : i32
    return %c0_i32, %c0_i32_0 : i32, i32
  }
  func.func @transform_5(%arg0: i32) -> (i32, i32) {
    %c0_i32 = arith.constant 0 : i32
    %c0_i32_0 = arith.constant 0 : i32
    %c0_i32_1 = arith.constant 0 : i32
    return %c0_i32, %c0_i32_0 : i32, i32
  }
  func.func @transform_6(%arg0: i32) -> (i32, i32) {
    %c0_i32 = arith.constant 0 : i32
    %c0_i32_0 = arith.constant 0 : i32
    %c0_i32_1 = arith.constant 0 : i32
    return %c0_i32, %c0_i32_0 : i32, i32
  }
  func.func @transform_7(%arg0: i32) -> (i32, i32) {
    %c0_i32 = arith.constant 0 : i32
    %c0_i32_0 = arith.constant 0 : i32
    %c0_i32_1 = arith.constant 0 : i32
    return %c0_i32, %c0_i32_0 : i32, i32
  }
  func.func @transform_8(%arg0: i32) -> (i32, i32) {
    %c0_i32 = arith.constant 0 : i32
    %c0_i32_0 = arith.constant 0 : i32
    %c0_i32_1 = arith.constant 0 : i32
    return %c0_i32, %c0_i32_0 : i32, i32
  }
  func.func @transform_9(%arg0: i32) -> (i32, i32) {
    %c0_i32 = arith.constant 0 : i32
    %c0_i32_0 = arith.constant 0 : i32
    %c0_i32_1 = arith.constant 0 : i32
    return %c0_i32, %c0_i32_0 : i32, i32
  }
  func.func @transform_10(%arg0: i32) -> (i32, i32) {
    %c0_i32 = arith.constant 0 : i32
    %c0_i32_0 = arith.constant 0 : i32
    %c0_i32_1 = arith.constant 0 : i32
    return %c0_i32, %c0_i32_0 : i32, i32
  }
  func.func @transform_11(%arg0: i32) -> (i32, i32) {
    %c0_i32 = arith.constant 0 : i32
    %c0_i32_0 = arith.constant 0 : i32
    %c0_i32_1 = arith.constant 0 : i32
    return %c0_i32, %c0_i32_0 : i32, i32
  }
  func.func @transform_12(%arg0: i32) -> (i32, i32) {
    %c0_i32 = arith.constant 0 : i32
    %c0_i32_0 = arith.constant 0 : i32
    %c0_i32_1 = arith.constant 0 : i32
    return %c0_i32, %c0_i32_0 : i32, i32
  }
  func.func @transform_13(%arg0: i32) -> (i32, i32) {
    %c0_i32 = arith.constant 0 : i32
    %c0_i32_0 = arith.constant 0 : i32
    return %arg0, %c0_i32 : i32, i32
  }
}

</mosaic_0001>

<llo_original>
// kernel: tpu_custom_call.1
$region0: #{tpu_custom_call.1}
  #allocation0 [shape = 'u32[]', space=smem, size = 0x4, offset = 0x4, fixed_abs, tag = 'smem constant byte address 0x4 - core index']
  #allocation1 [shape = 'u32[144,128]{1,0:T(1,128)}', space=vmem, size = 0x12000, scoped, tag = 'internal scratch']
  %s0 = inlined_call_operand.vmem [shape: f32[16,32], index: 0, kind: input, shape index: {}]
  %s1 = inlined_call_operand.vmem [shape: bf16[32,96], index: 1, kind: input, shape index: {}]
  %s2 = inlined_call_operand.vmem [shape: f32[1,96], index: 2, kind: input, shape index: {}]
  %s3 = inlined_call_operand.vmem [shape: bf16[32,32], index: 3, kind: input, shape index: {}]
  %s4 = inlined_call_operand.vmem [shape: f32[1,32], index: 4, kind: input, shape index: {}]
  %s5 = inlined_call_operand.vmem [shape: f32[1,32], index: 5, kind: input, shape index: {}]
  %s6 = inlined_call_operand.vmem [shape: f32[1,32], index: 6, kind: input, shape index: {}]
  %s7 = inlined_call_operand.hbm [shape: bf16[32,64], index: 7, kind: input, shape index: {}]
  %s8 = inlined_call_operand.vmem [shape: f32[1,64], index: 8, kind: input, shape index: {}]
  %s9 = inlined_call_operand.vmem [shape: bf16[64,32], index: 9, kind: input, shape index: {}]
  %s10 = inlined_call_operand.vmem [shape: f32[1,32], index: 10, kind: input, shape index: {}]
  %s11 = inlined_call_operand.vmem [shape: f32[1,32], index: 11, kind: input, shape index: {}]
  %s12 = inlined_call_operand.vmem [shape: f32[1,32], index: 12, kind: input, shape index: {}]
  %s13 = inlined_call_operand.hbm [shape: f32[16,32], index: 13, kind: output, shape index: {}]
  %s14 = sld [smem:[#allocation0]]
  $region89: #{tpu_custom_call.1} parent=0
    _
  %s16 = ssub.s32 1, %s14
  %s17 = scalar_select 0, %s16, %s14
  $region1: #{tpu_custom_call.1} parent=0
    #allocation2 [shape = 'u8[8192]{0}', space=vmem, size = 0x2000, scoped, tag = 'input window, operand 7, single buffered']
    #allocation3 [shape = 's32[2]{0}', space=sflag, size = 0x8, scoped, tag = 'scoped memory for tpu_custom_call.1']
    #allocation4 [shape = 's32[2]{0}', space=sflag, size = 0x8, scoped, tag = 'scoped memory for tpu_custom_call.1']
    #allocation5 [shape = 'u8[8192]{0}', space=vmem, size = 0x2000, scoped, tag = 'output window, operand 0']
    %18 = vsyncpa [#allocation3], 0
    %19 = vsyncpa [#allocation4], 0
    %s20 = scalar_lea.sflag [#allocation4], 1
    %21 = vsyncpa %s20, 0
    loop: start=0, step=1, limit=4
    $region2: #{tpu_custom_call.1} parent=1 // loop_pre_header
      _
    $region3: #{tpu_custom_call.1} parent=1 // loop_header
      %s23 = sphi 0, %s27
      %p24 = scmp.ge.s32.totalorder %s23, 4
      %s33 = sphi 0, %s35
      %s36 = sphi 0, %s33
      %s37 = sphi 0, %s36
      %s53 = sphi 0, %s37
      %s57 = sphi 0, %s57
      %s59 = sphi 0, %s57
      %s60 = sphi 0, %s59
      %s74 = sphi 0, %s60
      %s78 = sphi 0, %s78
      %s80 = sphi 0, %s78
      %s81 = sphi 0, %s80
      %s95 = sphi 0, %s81
      %s99 = sphi 0, %s99
      %s101 = sphi 0, %s99
      %s102 = sphi 0, %s101
      %s116 = sphi 0, %s102
      %s120 = sphi 0, %s120
      %s122 = sphi 0, %s120
      %s123 = sphi 0, %s122
      %s137 = sphi 0, %s123
      %s141 = sphi 0, %s141
      %s143 = sphi 0, %s141
      %s144 = sphi 0, %s143
      %s158 = sphi 0, %s144
      %s162 = sphi 0, %s162
      %s164 = sphi 0, %s162
      %s165 = sphi 0, %s164
      %s179 = sphi 0, %s165
      %s183 = sphi 0, %s183
      %s185 = sphi 0, %s183
      %s186 = sphi 0, %s185
      %s200 = sphi 0, %s186
      %s204 = sphi 0, %s204
      %s206 = sphi 0, %s204
      %s207 = sphi 0, %s206
      %s221 = sphi 0, %s207
      %s225 = sphi 0, %s225
      %s227 = sphi 0, %s225
      %s228 = sphi 0, %s227
      %s242 = sphi 0, %s228
      %s246 = sphi 0, %s246
      %s248 = sphi 0, %s246
      %s249 = sphi 0, %s248
      %s263 = sphi 0, %s249
      %s267 = sphi 0, %s267
      %s269 = sphi 0, %s267
      %s270 = sphi 0, %s269
      %s284 = sphi 0, %s270
      %s288 = sphi 0, %s288
      %s290 = sphi 0, %s288
      %s291 = sphi 0, %s290
      %s305 = sphi 0, %s291
      %s311 = sphi 0, %s313
      %s314 = sphi 0, %s311
      %s315 = sphi 0, %s314
      %s331 = sphi 0, %s315
    $region4: #{tpu_custom_call.1} parent=1 // loop_header_branch
      %26 = sbr.rel (%p24) target = $region8
    $region5: #{tpu_custom_call.1} parent=1 // loop_body
      %s28 = ssub.s32 %s23, 1
      %s29 = ssub.s32 %s23, 2
      %s30 = sadd.s32 %s23, 1
      %s31 = ssub.s32 %s23, %s30
      %p32 = scmp.eq.s32.totalorder %s31, 0
      %s34 = sadd.s32 %s33, 1
      %s35 = scalar_select %p32, %s33, %s34
      %p38 = pneg %p32
      %p39 = scmp.eq.s32.totalorder %s23, 1
      %p40 = por %p38, %p39
      %p41 = scmp.ne.s32.totalorder %s33, %s36
      %p42 = scmp.eq.s32.totalorder %s23, 0
      %p43 = por %p41, %p42
      %p44 = scmp.ne.s32.totalorder %s33, %s36
      %p45 = scmp.eq.s32.totalorder %s28, 1
      %p46 = por %p44, %p45
      %p47 = scmp.ne.s32.totalorder %s36, %s37
      %p48 = scmp.eq.s32.totalorder %s28, 0
      %p49 = por %p47, %p48
      %p50 = scmp.ne.s32.totalorder %s36, %s37
      %p51 = scmp.eq.s32.totalorder %s29, 1
      %p52 = por %p50, %p51
      %p54 = scmp.ne.s32.totalorder %s37, %s53
      %p55 = scmp.eq.s32.totalorder %s29, 0
      %p56 = por %p54, %p55
      %s58 = sadd.s32 %s57, 1
      %p61 = scmp.eq.s32.totalorder %s23, 1
      %p62 = scmp.ne.s32.totalorder %s57, %s59
      %p63 = scmp.eq.s32.totalorder %s23, 0
      %p64 = por %p62, %p63
      %p65 = scmp.ne.s32.totalorder %s57, %s59
      %p66 = scmp.eq.s32.totalorder %s28, 1
      %p67 = por %p65, %p66
      %p68 = scmp.ne.s32.totalorder %s59, %s60
      %p69 = scmp.eq.s32.totalorder %s28, 0
      %p70 = por %p68, %p69
      %p71 = scmp.ne.s32.totalorder %s59, %s60
      %p72 = scmp.eq.s32.totalorder %s29, 1
      %p73 = por %p71, %p72
      %p75 = scmp.ne.s32.totalorder %s60, %s74
      %p76 = scmp.eq.s32.totalorder %s29, 0
      %p77 = por %p75, %p76
      %s79 = sadd.s32 %s78, 1
      %p82 = scmp.eq.s32.totalorder %s23, 1
      %p83 = scmp.ne.s32.totalorder %s78, %s80
      %p84 = scmp.eq.s32.totalorder %s23, 0
      %p85 = por %p83, %p84
      %p86 = scmp.ne.s32.totalorder %s78, %s80
      %p87 = scmp.eq.s32.totalorder %s28, 1
      %p88 = por %p86, %p87
      %p89 = scmp.ne.s32.totalorder %s80, %s81
      %p90 = scmp.eq.s32.totalorder %s28, 0
      %p91 = por %p89, %p90
      %p92 = scmp.ne.s32.totalorder %s80, %s81
      %p93 = scmp.eq.s32.totalorder %s29, 1
      %p94 = por %p92, %p93
      %p96 = scmp.ne.s32.totalorder %s81, %s95
      %p97 = scmp.eq.s32.totalorder %s29, 0
      %p98 = por %p96, %p97
      %s100 = sadd.s32 %s99, 1
      %p103 = scmp.eq.s32.totalorder %s23, 1
      %p104 = scmp.ne.s32.totalorder %s99, %s101
      %p105 = scmp.eq.s32.totalorder %s23, 0
      %p106 = por %p104, %p105
      %p107 = scmp.ne.s32.totalorder %s99, %s101
      %p108 = scmp.eq.s32.totalorder %s28, 1
      %p109 = por %p107, %p108
      %p110 = scmp.ne.s32.totalorder %s101, %s102
      %p111 = scmp.eq.s32.totalorder %s28, 0
      %p112 = por %p110, %p111
      %p113 = scmp.ne.s32.totalorder %s101, %s102
      %p114 = scmp.eq.s32.totalorder %s29, 1
      %p115 = por %p113, %p114
      %p117 = scmp.ne.s32.totalorder %s102, %s116
      %p118 = scmp.eq.s32.totalorder %s29, 0
      %p119 = por %p117, %p118
      %s121 = sadd.s32 %s120, 1
      %p124 = scmp.eq.s32.totalorder %s23, 1
      %p125 = scmp.ne.s32.totalorder %s120, %s122
      %p126 = scmp.eq.s32.totalorder %s23, 0
      %p127 = por %p125, %p126
      %p128 = scmp.ne.s32.totalorder %s120, %s122
      %p129 = scmp.eq.s32.totalorder %s28, 1
      %p130 = por %p128, %p129
      %p131 = scmp.ne.s32.totalorder %s122, %s123
      %p132 = scmp.eq.s32.totalorder %s28, 0
      %p133 = por %p131, %p132
      %p134 = scmp.ne.s32.totalorder %s122, %s123
      %p135 = scmp.eq.s32.totalorder %s29, 1
      %p136 = por %p134, %p135
      %p138 = scmp.ne.s32.totalorder %s123, %s137
      %p139 = scmp.eq.s32.totalorder %s29, 0
      %p140 = por %p138, %p139
      %s142 = sadd.s32 %s141, 1
      %p145 = scmp.eq.s32.totalorder %s23, 1
      %p146 = scmp.ne.s32.totalorder %s141, %s143
      %p147 = scmp.eq.s32.totalorder %s23, 0
      %p148 = por %p146, %p147
      %p149 = scmp.ne.s32.totalorder %s141, %s143
      %p150 = scmp.eq.s32.totalorder %s28, 1
      %p151 = por %p149, %p150
      %p152 = scmp.ne.s32.totalorder %s143, %s144
      %p153 = scmp.eq.s32.totalorder %s28, 0
      %p154 = por %p152, %p153
      %p155 = scmp.ne.s32.totalorder %s143, %s144
      %p156 = scmp.eq.s32.totalorder %s29, 1
      %p157 = por %p155, %p156
      %p159 = scmp.ne.s32.totalorder %s144, %s158
      %p160 = scmp.eq.s32.totalorder %s29, 0
      %p161 = por %p159, %p160
      %s163 = sadd.s32 %s162, 1
      %p166 = scmp.eq.s32.totalorder %s23, 1
      %p167 = scmp.ne.s32.totalorder %s162, %s164
      %p168 = scmp.eq.s32.totalorder %s23, 0
      %p169 = por %p167, %p168
      %p170 = scmp.ne.s32.totalorder %s162, %s164
      %p171 = scmp.eq.s32.totalorder %s28, 1
      %p172 = por %p170, %p171
      %p173 = scmp.ne.s32.totalorder %s164, %s165
      %p174 = scmp.eq.s32.totalorder %s28, 0
      %p175 = por %p173, %p174
      %p176 = scmp.ne.s32.totalorder %s164, %s165
      %p177 = scmp.eq.s32.totalorder %s29, 1
      %p178 = por %p176, %p177
      %p180 = scmp.ne.s32.totalorder %s165, %s179
      %p181 = scmp.eq.s32.totalorder %s29, 0
      %p182 = por %p180, %p181
      %s184 = sadd.s32 %s183, 1
      %p187 = scmp.eq.s32.totalorder %s23, 1
      %p188 = scmp.ne.s32.totalorder %s183, %s185
      %p189 = scmp.eq.s32.totalorder %s23, 0
      %p190 = por %p188, %p189
      %p191 = scmp.ne.s32.totalorder %s183, %s185
      %p192 = scmp.eq.s32.totalorder %s28, 1
      %p193 = por %p191, %p192
      %p194 = scmp.ne.s32.totalorder %s185, %s186
      %p195 = scmp.eq.s32.totalorder %s28, 0
      %p196 = por %p194, %p195
      %p197 = scmp.ne.s32.totalorder %s185, %s186
      %p198 = scmp.eq.s32.totalorder %s29, 1
      %p199 = por %p197, %p198
      %p201 = scmp.ne.s32.totalorder %s186, %s200
      %p202 = scmp.eq.s32.totalorder %s29, 0
      %p203 = por %p201, %p202
      %s205 = sadd.s32 %s204, 1
      %p208 = scmp.eq.s32.totalorder %s23, 1
      %p209 = scmp.ne.s32.totalorder %s204, %s206
      %p210 = scmp.eq.s32.totalorder %s23, 0
      %p211 = por %p209, %p210
      %p212 = scmp.ne.s32.totalorder %s204, %s206
      %p213 = scmp.eq.s32.totalorder %s28, 1
      %p214 = por %p212, %p213
      %p215 = scmp.ne.s32.totalorder %s206, %s207
      %p216 = scmp.eq.s32.totalorder %s28, 0
      %p217 = por %p215, %p216
      %p218 = scmp.ne.s32.totalorder %s206, %s207
      %p219 = scmp.eq.s32.totalorder %s29, 1
      %p220 = por %p218, %p219
      %p222 = scmp.ne.s32.totalorder %s207, %s221
      %p223 = scmp.eq.s32.totalorder %s29, 0
      %p224 = por %p222, %p223
      %s226 = sadd.s32 %s225, 1
      %p229 = scmp.eq.s32.totalorder %s23, 1
      %p230 = scmp.ne.s32.totalorder %s225, %s227
      %p231 = scmp.eq.s32.totalorder %s23, 0
      %p232 = por %p230, %p231
      %p233 = scmp.ne.s32.totalorder %s225, %s227
      %p234 = scmp.eq.s32.totalorder %s28, 1
      %p235 = por %p233, %p234
      %p236 = scmp.ne.s32.totalorder %s227, %s228
      %p237 = scmp.eq.s32.totalorder %s28, 0
      %p238 = por %p236, %p237
      %p239 = scmp.ne.s32.totalorder %s227, %s228
      %p240 = scmp.eq.s32.totalorder %s29, 1
      %p241 = por %p239, %p240
      %p243 = scmp.ne.s32.totalorder %s228, %s242
      %p244 = scmp.eq.s32.totalorder %s29, 0
      %p245 = por %p243, %p244
      %s247 = sadd.s32 %s246, 1
      %p250 = scmp.eq.s32.totalorder %s23, 1
      %p251 = scmp.ne.s32.totalorder %s246, %s248
      %p252 = scmp.eq.s32.totalorder %s23, 0
      %p253 = por %p251, %p252
      %p254 = scmp.ne.s32.totalorder %s246, %s248
      %p255 = scmp.eq.s32.totalorder %s28, 1
      %p256 = por %p254, %p255
      %p257 = scmp.ne.s32.totalorder %s248, %s249
      %p258 = scmp.eq.s32.totalorder %s28, 0
      %p259 = por %p257, %p258
      %p260 = scmp.ne.s32.totalorder %s248, %s249
      %p261 = scmp.eq.s32.totalorder %s29, 1
      %p262 = por %p260, %p261
      %p264 = scmp.ne.s32.totalorder %s249, %s263
      %p265 = scmp.eq.s32.totalorder %s29, 0
      %p266 = por %p264, %p265
      %s268 = sadd.s32 %s267, 1
      %p271 = scmp.eq.s32.totalorder %s23, 1
      %p272 = scmp.ne.s32.totalorder %s267, %s269
      %p273 = scmp.eq.s32.totalorder %s23, 0
      %p274 = por %p272, %p273
      %p275 = scmp.ne.s32.totalorder %s267, %s269
      %p276 = scmp.eq.s32.totalorder %s28, 1
      %p277 = por %p275, %p276
      %p278 = scmp.ne.s32.totalorder %s269, %s270
      %p279 = scmp.eq.s32.totalorder %s28, 0
      %p280 = por %p278, %p279
      %p281 = scmp.ne.s32.totalorder %s269, %s270
      %p282 = scmp.eq.s32.totalorder %s29, 1
      %p283 = por %p281, %p282
      %p285 = scmp.ne.s32.totalorder %s270, %s284
      %p286 = scmp.eq.s32.totalorder %s29, 0
      %p287 = por %p285, %p286
      %s289 = sadd.s32 %s288, 1
      %p292 = scmp.eq.s32.totalorder %s23, 1
      %p293 = scmp.ne.s32.totalorder %s288, %s290
      %p294 = scmp.eq.s32.totalorder %s23, 0
      %p295 = por %p293, %p294
      %p296 = scmp.ne.s32.totalorder %s288, %s290
      %p297 = scmp.eq.s32.totalorder %s28, 1
      %p298 = por %p296, %p297
      %p299 = scmp.ne.s32.totalorder %s290, %s291
      %p300 = scmp.eq.s32.totalorder %s28, 0
      %p301 = por %p299, %p300
      %p302 = scmp.ne.s32.totalorder %s290, %s291
      %p303 = scmp.eq.s32.totalorder %s29, 1
      %p304 = por %p302, %p303
      %p306 = scmp.ne.s32.totalorder %s291, %s305
      %p307 = scmp.eq.s32.totalorder %s29, 0
      %p308 = por %p306, %p307
      %s309 = ssub.s32 %s23, %s30
      %p310 = scmp.eq.s32.totalorder %s309, 0
      %s312 = sadd.s32 %s311, 1
      %s313 = scalar_select %p310, %s311, %s312
      %p316 = pneg %p310
      %p317 = scmp.eq.s32.totalorder %s23, 1
      %p318 = por %p316, %p317
      %p319 = scmp.ne.s32.totalorder %s311, %s314
      %p320 = scmp.eq.s32.totalorder %s23, 0
      %p321 = por %p319, %p320
      %p322 = scmp.ne.s32.totalorder %s311, %s314
      %p323 = scmp.eq.s32.totalorder %s28, 1
      %p324 = por %p322, %p323
      %p325 = scmp.ne.s32.totalorder %s314, %s315
      %p326 = scmp.eq.s32.totalorder %s28, 0
      %p327 = por %p325, %p326
      %p328 = scmp.ne.s32.totalorder %s314, %s315
      %p329 = scmp.eq.s32.totalorder %s29, 1
      %p330 = por %p328, %p329
      %p332 = scmp.ne.s32.totalorder %s315, %s331
      %p333 = scmp.eq.s32.totalorder %s29, 0
      %p334 = por %p332, %p333
      %p335 = scmp.le.s32.totalorder 1, %s23
      %p336 = scmp.lt.s32.totalorder %s23, 3
      %p337 = pnand %p335, %p336
      %p338 = pneg %p337
      // Predicated region
      $region9: #{tpu_custom_call.1} parent=5 // pred_check
        _
      $region10: #{tpu_custom_call.1} parent=5 // pred_check_branch
        %340 = sbr.rel (%p337) target = $region12
      $region11: #{tpu_custom_call.1} parent=5 // pred_region
        %s341 = ssub.s32 %s23, 1
        // Predicated region
        $region13: #{tpu_custom_call.1} parent=11 // pred_check
          %p342 = pneg %p70
        $region14: #{tpu_custom_call.1} parent=11 // pred_check_branch
          %344 = sbr.rel (%p342) target = $region16
        $region15: #{tpu_custom_call.1} parent=11 // pred_region
          _
        $region16: #{tpu_custom_call.1} parent=11 // pred_fallthru
          _
        // Predicated region
        $region17: #{tpu_custom_call.1} parent=11 // pred_check
          %p345 = pneg %p91
        $region18: #{tpu_custom_call.1} parent=11 // pred_check_branch
          %347 = sbr.rel (%p345) target = $region20
        $region19: #{tpu_custom_call.1} parent=11 // pred_region
          _
        $region20: #{tpu_custom_call.1} parent=11 // pred_fallthru
          _
        // Predicated region
        $region21: #{tpu_custom_call.1} parent=11 // pred_check
          %p348 = pneg %p112
        $region22: #{tpu_custom_call.1} parent=11 // pred_check_branch
          %350 = sbr.rel (%p348) target = $region24
        $region23: #{tpu_custom_call.1} parent=11 // pred_region
          _
        $region24: #{tpu_custom_call.1} parent=11 // pred_fallthru
          _
        // Predicated region
        $region25: #{tpu_custom_call.1} parent=11 // pred_check
          %p351 = pneg %p133
        $region26: #{tpu_custom_call.1} parent=11 // pred_check_branch
          %353 = sbr.rel (%p351) target = $region28
        $region27: #{tpu_custom_call.1} parent=11 // pred_region
          _
        $region28: #{tpu_custom_call.1} parent=11 // pred_fallthru
          _
        // Predicated region
        $region29: #{tpu_custom_call.1} parent=11 // pred_check
          %p354 = pneg %p154
        $region30: #{tpu_custom_call.1} parent=11 // pred_check_branch
          %356 = sbr.rel (%p354) target = $region32
        $region31: #{tpu_custom_call.1} parent=11 // pred_region
          _
        $region32: #{tpu_custom_call.1} parent=11 // pred_fallthru
          _
        // Predicated region
        $region33: #{tpu_custom_call.1} parent=11 // pred_check
          %p357 = pneg %p175
        $region34: #{tpu_custom_call.1} parent=11 // pred_check_branch
          %359 = sbr.rel (%p357) target = $region36
        $region35: #{tpu_custom_call.1} parent=11 // pred_region
          _
        $region36: #{tpu_custom_call.1} parent=11 // pred_fallthru
          _
        // Predicated region
        $region37: #{tpu_custom_call.1} parent=11 // pred_check
          %p360 = pneg %p196
        $region38: #{tpu_custom_call.1} parent=11 // pred_check_branch
          %362 = sbr.rel (%p360) target = $region40
        $region39: #{tpu_custom_call.1} parent=11 // pred_region
          %s364 = ssub.s32 256, 256
          %365 = vsyncadd [#allocation3], %s364
          %s366 = sshll.u32 [#allocation2], 4
          %s367 = int_to_ptr.vmem [resolvable:$true] %s366
          %372 = dma.hbm_to_vmem [thread:$0]  %s7, 256, %s367, [#allocation3], 64, 64, 4
        $region40: #{tpu_custom_call.1} parent=11 // pred_fallthru
          _
        // Predicated region
        $region41: #{tpu_custom_call.1} parent=11 // pred_check
          %p373 = pneg %p217
        $region42: #{tpu_custom_call.1} parent=11 // pred_check_branch
          %375 = sbr.rel (%p373) target = $region44
        $region43: #{tpu_custom_call.1} parent=11 // pred_region
          _
        $region44: #{tpu_custom_call.1} parent=11 // pred_fallthru
          _
        // Predicated region
        $region45: #{tpu_custom_call.1} parent=11 // pred_check
          %p376 = pneg %p238
        $region46: #{tpu_custom_call.1} parent=11 // pred_check_branch
          %378 = sbr.rel (%p376) target = $region48
        $region47: #{tpu_custom_call.1} parent=11 // pred_region
          _
        $region48: #{tpu_custom_call.1} parent=11 // pred_fallthru
          _
        // Predicated region
        $region49: #{tpu_custom_call.1} parent=11 // pred_check
          %p379 = pneg %p259
        $region50: #{tpu_custom_call.1} parent=11 // pred_check_branch
          %381 = sbr.rel (%p379) target = $region52
        $region51: #{tpu_custom_call.1} parent=11 // pred_region
          _
        $region52: #{tpu_custom_call.1} parent=11 // pred_fallthru
          _
        // Predicated region
        $region53: #{tpu_custom_call.1} parent=11 // pred_check
          %p382 = pneg %p280
        $region54: #{tpu_custom_call.1} parent=11 // pred_check_branch
          %384 = sbr.rel (%p382) target = $region56
        $region55: #{tpu_custom_call.1} parent=11 // pred_region
          _
        $region56: #{tpu_custom_call.1} parent=11 // pred_fallthru
          _
        // Predicated region
        $region57: #{tpu_custom_call.1} parent=11 // pred_check
          %p385 = pneg %p301
        $region58: #{tpu_custom_call.1} parent=11 // pred_check_branch
          %387 = sbr.rel (%p385) target = $region60
        $region59: #{tpu_custom_call.1} parent=11 // pred_region
          _
        $region60: #{tpu_custom_call.1} parent=11 // pred_fallthru
          _
      $region12: #{tpu_custom_call.1} parent=5 // pred_fallthru
        _
      %p388 = scmp.lt.s32.totalorder %s23, 2
      // Predicated region
      $region61: #{tpu_custom_call.1} parent=5 // pred_check
        %p389 = pneg %p388
      $region62: #{tpu_custom_call.1} parent=5 // pred_check_branch
        %391 = sbr.rel (%p389) target = $region64
      $region63: #{tpu_custom_call.1} parent=5 // pred_region
        // Predicated region
        $region65: #{tpu_custom_call.1} parent=63 // pred_check
          %p392 = pneg %p43
        $region66: #{tpu_custom_call.1} parent=63 // pred_check_branch
          %394 = sbr.rel (%p392) target = $region68
        $region67: #{tpu_custom_call.1} parent=63 // pred_region
          %p395 = scmp.lt.s32.totalorder %s23, 1
          %s396 = scalar_select %p395, %s23, 1
          %s397 = smul.addr %s396, 8
          %s398 = scalar_lea.vmem %s0, %s397
        $region68: #{tpu_custom_call.1} parent=63 // pred_fallthru
          _
      $region64: #{tpu_custom_call.1} parent=5 // pred_fallthru
        _
      %p399 = scmp.le.s32.totalorder 1, %s23
      %p400 = scmp.lt.s32.totalorder %s23, 3
      %p401 = pnand %p399, %p400
      %p402 = pneg %p401
      // Predicated region
      $region69: #{tpu_custom_call.1} parent=5 // pred_check
        _
      $region70: #{tpu_custom_call.1} parent=5 // pred_check_branch
        %404 = sbr.rel (%p401) target = $region72
      $region71: #{tpu_custom_call.1} parent=5 // pred_region
        %s405 = ssub.s32 %s23, 1
        // Predicated region
        $region73: #{tpu_custom_call.1} parent=71 // pred_check
          %p406 = pneg %p196
        $region74: #{tpu_custom_call.1} parent=71 // pred_check_branch
          %408 = sbr.rel (%p406) target = $region76
        $region75: #{tpu_custom_call.1} parent=71 // pred_region
          %409 = dma.done [#allocation3], 256
        $region76: #{tpu_custom_call.1} parent=71 // pred_fallthru
          _
        %p410 = scmp.lt.s32.totalorder %s28, 1
        %s411 = scalar_select %p410, %s28, 1
        %s412 = smul.addr %s411, 8
        %s413 = scalar_lea.vmem %s0, %s412
        %p414 = pneg %p49
        %p415 = pneg %p46
        %p416 = pneg %p70
        %p417 = pneg %p67
        %p418 = pneg %p91
        %p419 = pneg %p88
        %p420 = pneg %p112
        %p421 = pneg %p109
        %p422 = pneg %p133
        %p423 = pneg %p130
        %p424 = pneg %p154
        %p425 = pneg %p151
        %p426 = pneg %p175
        %p427 = pneg %p172
        %p428 = pneg %p196
        %p429 = pneg %p193
        %p430 = pneg %p217
        %p431 = pneg %p214
        %p432 = pneg %p238
        %p433 = pneg %p235
        %p434 = pneg %p259
        %p435 = pneg %p256
        %p436 = pneg %p280
        %p437 = pneg %p277
        %p438 = pneg %p301
        %p439 = pneg %p298
        %p440 = pneg %p327
        %p441 = pneg %p324
        %s442 = sand.u32 %s314, 1
        %s443 = scalar_lea.sflag [#allocation4], %s442
        %s444 = sand.u32 %s314, 1
        %s445 = smul.addr %s444, 8
        %s446 = scalar_lea.vmem [#allocation5], %s445
        %p447 = scmp.lt.s32.totalorder %s28, 1
        %s448 = scalar_select %p447, %s28, 1
        %s449 = smul.addr %s448, 8
        %s450 = scalar_lea.vmem %s0, %s449
        %v452 = vld [vmem:[%s450] sm:$0xff]
        %v453 = vpack.c.bf16 %v452, %v452
        %v454 = vld [vmem:[%s1] sm:$0xf]
        %v455 = vld [vmem:[%s1 + $0x4] sm:$0xf]
        %v456 = vld [vmem:[%s1 + $0x8] sm:$0xf]
        %v457 = vld [vmem:[%s1 + $0xc] sm:$0xf]
        %v458 = vld [vmem:[%s2] sm:$0x1]
        %v460 = vlaneseq
        %v461 = vshrl.u32 %v460, 7
        %v462 = vsub.s32 0, %v461
        %v463 = vrot.slane %v458, %v462
        %v469 = vunpack.c.l.b16 %v454
        %v470 = vunpack.c.l.b16 %v455
        %v471 = vunpack.c.l.b16 %v456
        %v472 = vunpack.c.l.b16 %v457
        %v473 = vpack.c.b16 %v470, %v469
        %v474 = vpack.c.b16 %v472, %v471
        %vm477 = vcmask 261120
        %v479 = vsel %vm477, %v453, 0
        %481 = vmatprep.subr.bf16.mxu0 0
        %482 = vmatpush1.bf16.msra.mxu0 %v473
        %483 = vmatprep.subr.bf16.mxu0 0
        %484 = vmatpush1.bf16.msra.mxu0 %v474
        %485 = vmatprep.subr.bf16.mxu0 0
        %486 = vmatpush1.bf16.msra.mxu0 0
        %487 = vmatprep.subr.bf16.mxu0 0
        %488 = vmatpush1.bf16.msra.mxu0 0
        %489 = vmatprep.subr.bf16.mxu0 0
        %490 = vmatpush1.bf16.msra.mxu0 0
        %491 = vmatprep.subr.bf16.mxu0 0
        %492 = vmatpush1.bf16.msra.mxu0 0
        %493 = vmatprep.subr.bf16.mxu0 0
        %494 = vmatpush1.bf16.msra.mxu0 0
        %495 = vmatprep.subr.bf16.mxu0 0
        %496 = vmatpush1.bf16.msra.mxu0 0
        %497 = vmatprep.subr.bf16.mxu0 0
        %498 = vmatpush1.bf16.msra.mxu0 0
        %499 = vmatprep.subr.bf16.mxu0 0
        %500 = vmatpush1.bf16.msra.mxu0 0
        %501 = vmatprep.subr.bf16.mxu0 0
        %502 = vmatpush1.bf16.msra.mxu0 0
        %503 = vmatprep.subr.bf16.mxu0 0
        %504 = vmatpush1.bf16.msra.mxu0 0
        %505 = vmatprep.subr.bf16.mxu0 0
        %506 = vmatpush1.bf16.msra.mxu0 0
        %507 = vmatprep.subr.bf16.mxu0 0
        %508 = vmatpush1.bf16.msra.mxu0 0
        %509 = vmatprep.subr.bf16.mxu0 0
        %510 = vmatpush1.bf16.msra.mxu0 0
        %511 = vmatprep.subr.bf16.mxu0 0
        %512 = vmatpush1.bf16.msra.mxu0 0
        %513 = vmatprep.mubr.bf16.mxu0 0
        %514 = vmatmul.mubr.bf16.gmra.mrb[0].mxu0 %v479
        %v515 = vpop.f32.mrb[0].mxu0
        %v516 = vadd.f32 %v463, %v515
        %v517 = vpop.f32.mrb[0].mxu0
        %v518 = vpop.f32.mrb[0].mxu0
        %v519 = vpop.f32.mrb[0].mxu0
        %520 = vdwg.mxu0
        %v521 = vpack.c.bf16 %v516, %v516
        %523 = vrot.lane.b32.xlu0 %v521, 96
        %v524 = vpop.permute.xlu0 %523
        %vm525 = vcmask 64512
        %v527 = vsel %vm525, %v521, 0
        %v530 = vsel %vm525, %v524, 0
        %532 = vmatprep.subr.bf16.mxu0 0
        %533 = vmatpush1.bf16.xpose.msra.mxu0 %v530
        %534 = vmatprep.subr.bf16.mxu0 0
        %535 = vmatpush1.bf16.xpose.msra.mxu0 0
        %536 = vmatprep.subr.bf16.mxu0 0
        %537 = vmatpush1.bf16.xpose.msra.mxu0 0
        %538 = vmatprep.subr.bf16.mxu0 0
        %539 = vmatpush1.bf16.xpose.msra.mxu0 0
        %540 = vmatprep.subr.bf16.mxu0 0
        %541 = vmatpush1.bf16.xpose.msra.mxu0 0
        %542 = vmatprep.subr.bf16.mxu0 0
        %543 = vmatpush1.bf16.xpose.msra.mxu0 0
        %544 = vmatprep.subr.bf16.mxu0 0
        %545 = vmatpush1.bf16.xpose.msra.mxu0 0
        %546 = vmatprep.subr.bf16.mxu0 0
        %547 = vmatpush1.bf16.xpose.msra.mxu0 0
        %548 = vmatprep.subr.bf16.mxu0 0
        %549 = vmatpush1.bf16.xpose.msra.mxu0 0
        %550 = vmatprep.subr.bf16.mxu0 0
        %551 = vmatpush1.bf16.xpose.msra.mxu0 0
        %552 = vmatprep.subr.bf16.mxu0 0
        %553 = vmatpush1.bf16.xpose.msra.mxu0 0
        %554 = vmatprep.subr.bf16.mxu0 0
        %555 = vmatpush1.bf16.xpose.msra.mxu0 0
        %556 = vmatprep.subr.bf16.mxu0 0
        %557 = vmatpush1.bf16.xpose.msra.mxu0 0
        %558 = vmatprep.subr.bf16.mxu0 0
        %559 = vmatpush1.bf16.xpose.msra.mxu0 0
        %560 = vmatprep.subr.bf16.mxu0 0
        %561 = vmatpush1.bf16.xpose.msra.mxu0 0
        %562 = vmatprep.subr.bf16.mxu0 0
        %563 = vmatpush1.bf16.xpose.msra.mxu0 0
        %564 = vmatprep.mubr.bf16.mxu0 0
        %565 = vmatmul.mubr.bf16.gmra.mrb[0].mxu0 %v527
        %v566 = vpop.f32.mrb[0].mxu0
        %v567 = vadd.f32 0.0, %v566
        %v568 = vpop.f32.mrb[0].mxu0
        %v569 = vpop.f32.mrb[0].mxu0
        %v570 = vpop.f32.mrb[0].mxu0
        %571 = vdwg.mxu0
        %v572 = vmul.f32 %v567, 0.35355338
        %v573 = vsel %vm525, %v572, -inf
        %574 = vmax.xlane.f32.xlu0 %v573
        %v575 = vpop.xlane.xlu0 %574
        %v576 = vsub.f32 %v572, %v575
        %v577 = vmul.f32 %v576, 1.442695
        %v578 = vpow.pop %v577
        %v579 = vsel %vm525, %v578, 0.0
        %580 = vadd.xlane.f32.xlu0 %v579
        %v581 = vpop.xlane.xlu0 %580
        %v582 = vrcp.pop %v581
        %v583 = vmul.f32 %v578, %v582
        %v584 = vpack.c.bf16 %v583, %v583
        %585 = vrot.lane.b32.xlu0 %v521, 64
        %v586 = vpop.permute.xlu0 %585
        %v588 = vsel %vm525, %v584, 0
        %vm590 = vcmask 1043456
        %v592 = vsel %vm590, %v586, 0
        %594 = vmatprep.subr.bf16.mxu0 0
        %595 = vmatpush1.bf16.msra.mxu0 %v592
        %596 = vmatprep.subr.bf16.mxu0 0
        %597 = vmatpush1.bf16.msra.mxu0 0
        %598 = vmatprep.subr.bf16.mxu0 0
        %599 = vmatpush1.bf16.msra.mxu0 0
        %600 = vmatprep.subr.bf16.mxu0 0
        %601 = vmatpush1.bf16.msra.mxu0 0
        %602 = vmatprep.subr.bf16.mxu0 0
        %603 = vmatpush1.bf16.msra.mxu0 0
        %604 = vmatprep.subr.bf16.mxu0 0
        %605 = vmatpush1.bf16.msra.mxu0 0
        %606 = vmatprep.subr.bf16.mxu0 0
        %607 = vmatpush1.bf16.msra.mxu0 0
        %608 = vmatprep.subr.bf16.mxu0 0
        %609 = vmatpush1.bf16.msra.mxu0 0
        %610 = vmatprep.subr.bf16.mxu0 0
        %611 = vmatpush1.bf16.msra.mxu0 0
        %612 = vmatprep.subr.bf16.mxu0 0
        %613 = vmatpush1.bf16.msra.mxu0 0
        %614 = vmatprep.subr.bf16.mxu0 0
        %615 = vmatpush1.bf16.msra.mxu0 0
        %616 = vmatprep.subr.bf16.mxu0 0
        %617 = vmatpush1.bf16.msra.mxu0 0
        %618 = vmatprep.subr.bf16.mxu0 0
        %619 = vmatpush1.bf16.msra.mxu0 0
        %620 = vmatprep.subr.bf16.mxu0 0
        %621 = vmatpush1.bf16.msra.mxu0 0
        %622 = vmatprep.subr.bf16.mxu0 0
        %623 = vmatpush1.bf16.msra.mxu0 0
        %624 = vmatprep.subr.bf16.mxu0 0
        %625 = vmatpush1.bf16.msra.mxu0 0
        %626 = vmatprep.mubr.bf16.mxu0 0
        %627 = vmatmul.mubr.bf16.gmra.mrb[0].mxu0 %v588
        %v628 = vpop.f32.mrb[0].mxu0
        %v629 = vadd.f32 0.0, %v628
        %v630 = vpop.f32.mrb[0].mxu0
        %v631 = vpop.f32.mrb[0].mxu0
        %v632 = vpop.f32.mrb[0].mxu0
        %633 = vdwg.mxu0
        %634 = vrot.lane.b32.xlu0 %v521, 120
        %v635 = vpop.permute.xlu0 %634
        %636 = vrot.lane.b32.xlu0 %v521, 88
        %v637 = vpop.permute.xlu0 %636
        %v639 = vsel %vm525, %v635, 0
        %v642 = vsel %vm525, %v637, 0
        %644 = vmatprep.subr.bf16.mxu0 0
        %645 = vmatpush1.bf16.xpose.msra.mxu0 %v642
        %646 = vmatprep.subr.bf16.mxu0 0
        %647 = vmatpush1.bf16.xpose.msra.mxu0 0
        %648 = vmatprep.subr.bf16.mxu0 0
        %649 = vmatpush1.bf16.xpose.msra.mxu0 0
        %650 = vmatprep.subr.bf16.mxu0 0
        %651 = vmatpush1.bf16.xpose.msra.mxu0 0
        %652 = vmatprep.subr.bf16.mxu0 0
        %653 = vmatpush1.bf16.xpose.msra.mxu0 0
        %654 = vmatprep.subr.bf16.mxu0 0
        %655 = vmatpush1.bf16.xpose.msra.mxu0 0
        %656 = vmatprep.subr.bf16.mxu0 0
        %657 = vmatpush1.bf16.xpose.msra.mxu0 0
        %658 = vmatprep.subr.bf16.mxu0 0
        %659 = vmatpush1.bf16.xpose.msra.mxu0 0
        %660 = vmatprep.subr.bf16.mxu0 0
        %661 = vmatpush1.bf16.xpose.msra.mxu0 0
        %662 = vmatprep.subr.bf16.mxu0 0
        %663 = vmatpush1.bf16.xpose.msra.mxu0 0
        %664 = vmatprep.subr.bf16.mxu0 0
        %665 = vmatpush1.bf16.xpose.msra.mxu0 0
        %666 = vmatprep.subr.bf16.mxu0 0
        %667 = vmatpush1.bf16.xpose.msra.mxu0 0
        %668 = vmatprep.subr.bf16.mxu0 0
        %669 = vmatpush1.bf16.xpose.msra.mxu0 0
        %670 = vmatprep.subr.bf16.mxu0 0
        %671 = vmatpush1.bf16.xpose.msra.mxu0 0
        %672 = vmatprep.subr.bf16.mxu0 0
        %673 = vmatpush1.bf16.xpose.msra.mxu0 0
        %674 = vmatprep.subr.bf16.mxu0 0
        %675 = vmatpush1.bf16.xpose.msra.mxu0 0
        %676 = vmatprep.mubr.bf16.mxu0 0
        %677 = vmatmul.mubr.bf16.gmra.mrb[0].mxu0 %v639
        %v678 = vpop.f32.mrb[0].mxu0
        %v679 = vadd.f32 0.0, %v678
        %v680 = vpop.f32.mrb[0].mxu0
        %v681 = vpop.f32.mrb[0].mxu0
        %v682 = vpop.f32.mrb[0].mxu0
        %683 = vdwg.mxu0
        %v684 = vmul.f32 %v679, 0.35355338
        %v685 = vsel %vm525, %v684, -inf
        %686 = vmax.xlane.f32.xlu0 %v685
        %v687 = vpop.xlane.xlu0 %686
        %v688 = vsub.f32 %v684, %v687
        %v689 = vmul.f32 %v688, 1.442695
        %v690 = vpow.pop %v689
        %v691 = vsel %vm525, %v690, 0.0
        %692 = vadd.xlane.f32.xlu0 %v691
        %v693 = vpop.xlane.xlu0 %692
        %v694 = vrcp.pop %v693
        %v695 = vmul.f32 %v690, %v694
        %v696 = vpack.c.bf16 %v695, %v695
        %697 = vrot.lane.b32.xlu0 %v521, 56
        %v698 = vpop.permute.xlu0 %697
        %v700 = vsel %vm525, %v696, 0
        %v703 = vsel %vm590, %v698, 0
        %705 = vmatprep.subr.bf16.mxu0 0
        %706 = vmatpush1.bf16.msra.mxu0 %v703
        %707 = vmatprep.subr.bf16.mxu0 0
        %708 = vmatpush1.bf16.msra.mxu0 0
        %709 = vmatprep.subr.bf16.mxu0 0
        %710 = vmatpush1.bf16.msra.mxu0 0
        %711 = vmatprep.subr.bf16.mxu0 0
        %712 = vmatpush1.bf16.msra.mxu0 0
        %713 = vmatprep.subr.bf16.mxu0 0
        %714 = vmatpush1.bf16.msra.mxu0 0
        %715 = vmatprep.subr.bf16.mxu0 0
        %716 = vmatpush1.bf16.msra.mxu0 0
        %717 = vmatprep.subr.bf16.mxu0 0
        %718 = vmatpush1.bf16.msra.mxu0 0
        %719 = vmatprep.subr.bf16.mxu0 0
        %720 = vmatpush1.bf16.msra.mxu0 0
        %721 = vmatprep.subr.bf16.mxu0 0
        %722 = vmatpush1.bf16.msra.mxu0 0
        %723 = vmatprep.subr.bf16.mxu0 0
        %724 = vmatpush1.bf16.msra.mxu0 0
        %725 = vmatprep.subr.bf16.mxu0 0
        %726 = vmatpush1.bf16.msra.mxu0 0
        %727 = vmatprep.subr.bf16.mxu0 0
        %728 = vmatpush1.bf16.msra.mxu0 0
        %729 = vmatprep.subr.bf16.mxu0 0
        %730 = vmatpush1.bf16.msra.mxu0 0
        %731 = vmatprep.subr.bf16.mxu0 0
        %732 = vmatpush1.bf16.msra.mxu0 0
        %733 = vmatprep.subr.bf16.mxu0 0
        %734 = vmatpush1.bf16.msra.mxu0 0
        %735 = vmatprep.subr.bf16.mxu0 0
        %736 = vmatpush1.bf16.msra.mxu0 0
        %737 = vmatprep.mubr.bf16.mxu0 0
        %738 = vmatmul.mubr.bf16.gmra.mrb[0].mxu0 %v700
        %v739 = vpop.f32.mrb[0].mxu0
        %v740 = vadd.f32 0.0, %v739
        %v741 = vpop.f32.mrb[0].mxu0
        %v742 = vpop.f32.mrb[0].mxu0
        %v743 = vpop.f32.mrb[0].mxu0
        %744 = vdwg.mxu0
        %745 = vrot.lane.b32.xlu0 %v521, 112
        %v746 = vpop.permute.xlu0 %745
        %747 = vrot.lane.b32.xlu0 %v521, 80
        %v748 = vpop.permute.xlu0 %747
        %v750 = vsel %vm525, %v746, 0
        %v753 = vsel %vm525, %v748, 0
        %755 = vmatprep.subr.bf16.mxu0 0
        %756 = vmatpush1.bf16.xpose.msra.mxu0 %v753
        %757 = vmatprep.subr.bf16.mxu0 0
        %758 = vmatpush1.bf16.xpose.msra.mxu0 0
        %759 = vmatprep.subr.bf16.mxu0 0
        %760 = vmatpush1.bf16.xpose.msra.mxu0 0
        %761 = vmatprep.subr.bf16.mxu0 0
        %762 = vmatpush1.bf16.xpose.msra.mxu0 0
        %763 = vmatprep.subr.bf16.mxu0 0
        %764 = vmatpush1.bf16.xpose.msra.mxu0 0
        %765 = vmatprep.subr.bf16.mxu0 0
        %766 = vmatpush1.bf16.xpose.msra.mxu0 0
        %767 = vmatprep.subr.bf16.mxu0 0
        %768 = vmatpush1.bf16.xpose.msra.mxu0 0
        %769 = vmatprep.subr.bf16.mxu0 0
        %770 = vmatpush1.bf16.xpose.msra.mxu0 0
        %771 = vmatprep.subr.bf16.mxu0 0
        %772 = vmatpush1.bf16.xpose.msra.mxu0 0
        %773 = vmatprep.subr.bf16.mxu0 0
        %774 = vmatpush1.bf16.xpose.msra.mxu0 0
        %775 = vmatprep.subr.bf16.mxu0 0
        %776 = vmatpush1.bf16.xpose.msra.mxu0 0
        %777 = vmatprep.subr.bf16.mxu0 0
        %778 = vmatpush1.bf16.xpose.msra.mxu0 0
        %779 = vmatprep.subr.bf16.mxu0 0
        %780 = vmatpush1.bf16.xpose.msra.mxu0 0
        %781 = vmatprep.subr.bf16.mxu0 0
        %782 = vmatpush1.bf16.xpose.msra.mxu0 0
        %783 = vmatprep.subr.bf16.mxu0 0
        %784 = vmatpush1.bf16.xpose.msra.mxu0 0
        %785 = vmatprep.subr.bf16.mxu0 0
        %786 = vmatpush1.bf16.xpose.msra.mxu0 0
        %787 = vmatprep.mubr.bf16.mxu0 0
        %788 = vmatmul.mubr.bf16.gmra.mrb[0].mxu0 %v750
        %v789 = vpop.f32.mrb[0].mxu0
        %v790 = vadd.f32 0.0, %v789
        %v791 = vpop.f32.mrb[0].mxu0
        %v792 = vpop.f32.mrb[0].mxu0
        %v793 = vpop.f32.mrb[0].mxu0
        %794 = vdwg.mxu0
        %v795 = vmul.f32 %v790, 0.35355338
        %v796 = vsel %vm525, %v795, -inf
        %797 = vmax.xlane.f32.xlu0 %v796
        %v798 = vpop.xlane.xlu0 %797
        %v799 = vsub.f32 %v795, %v798
        %v800 = vmul.f32 %v799, 1.442695
        %v801 = vpow.pop %v800
        %v802 = vsel %vm525, %v801, 0.0
        %803 = vadd.xlane.f32.xlu0 %v802
        %v804 = vpop.xlane.xlu0 %803
        %v805 = vrcp.pop %v804
        %v806 = vmul.f32 %v801, %v805
        %v807 = vpack.c.bf16 %v806, %v806
        %808 = vrot.lane.b32.xlu0 %v521, 48
        %v809 = vpop.permute.xlu0 %808
        %v811 = vsel %vm525, %v807, 0
        %v814 = vsel %vm590, %v809, 0
        %816 = vmatprep.subr.bf16.mxu0 0
        %817 = vmatpush1.bf16.msra.mxu0 %v814
        %818 = vmatprep.subr.bf16.mxu0 0
        %819 = vmatpush1.bf16.msra.mxu0 0
        %820 = vmatprep.subr.bf16.mxu0 0
        %821 = vmatpush1.bf16.msra.mxu0 0
        %822 = vmatprep.subr.bf16.mxu0 0
        %823 = vmatpush1.bf16.msra.mxu0 0
        %824 = vmatprep.subr.bf16.mxu0 0
        %825 = vmatpush1.bf16.msra.mxu0 0
        %826 = vmatprep.subr.bf16.mxu0 0
        %827 = vmatpush1.bf16.msra.mxu0 0
        %828 = vmatprep.subr.bf16.mxu0 0
        %829 = vmatpush1.bf16.msra.mxu0 0
        %830 = vmatprep.subr.bf16.mxu0 0
        %831 = vmatpush1.bf16.msra.mxu0 0
        %832 = vmatprep.subr.bf16.mxu0 0
        %833 = vmatpush1.bf16.msra.mxu0 0
        %834 = vmatprep.subr.bf16.mxu0 0
        %835 = vmatpush1.bf16.msra.mxu0 0
        %836 = vmatprep.subr.bf16.mxu0 0
        %837 = vmatpush1.bf16.msra.mxu0 0
        %838 = vmatprep.subr.bf16.mxu0 0
        %839 = vmatpush1.bf16.msra.mxu0 0
        %840 = vmatprep.subr.bf16.mxu0 0
        %841 = vmatpush1.bf16.msra.mxu0 0
        %842 = vmatprep.subr.bf16.mxu0 0
        %843 = vmatpush1.bf16.msra.mxu0 0
        %844 = vmatprep.subr.bf16.mxu0 0
        %845 = vmatpush1.bf16.msra.mxu0 0
        %846 = vmatprep.subr.bf16.mxu0 0
        %847 = vmatpush1.bf16.msra.mxu0 0
        %848 = vmatprep.mubr.bf16.mxu0 0
        %849 = vmatmul.mubr.bf16.gmra.mrb[0].mxu0 %v811
        %v850 = vpop.f32.mrb[0].mxu0
        %v851 = vadd.f32 0.0, %v850
        %v852 = vpop.f32.mrb[0].mxu0
        %v853 = vpop.f32.mrb[0].mxu0
        %v854 = vpop.f32.mrb[0].mxu0
        %855 = vdwg.mxu0
        %856 = vrot.lane.b32.xlu0 %v521, 104
        %v857 = vpop.permute.xlu0 %856
        %858 = vrot.lane.b32.xlu0 %v521, 72
        %v859 = vpop.permute.xlu0 %858
        %v861 = vsel %vm525, %v857, 0
        %v864 = vsel %vm525, %v859, 0
        %866 = vmatprep.subr.bf16.mxu0 0
        %867 = vmatpush1.bf16.xpose.msra.mxu0 %v864
        %868 = vmatprep.subr.bf16.mxu0 0
        %869 = vmatpush1.bf16.xpose.msra.mxu0 0
        %870 = vmatprep.subr.bf16.mxu0 0
        %871 = vmatpush1.bf16.xpose.msra.mxu0 0
        %872 = vmatprep.subr.bf16.mxu0 0
        %873 = vmatpush1.bf16.xpose.msra.mxu0 0
        %874 = vmatprep.subr.bf16.mxu0 0
        %875 = vmatpush1.bf16.xpose.msra.mxu0 0
        %876 = vmatprep.subr.bf16.mxu0 0
        %877 = vmatpush1.bf16.xpose.msra.mxu0 0
        %878 = vmatprep.subr.bf16.mxu0 0
        %879 = vmatpush1.bf16.xpose.msra.mxu0 0
        %880 = vmatprep.subr.bf16.mxu0 0
        %881 = vmatpush1.bf16.xpose.msra.mxu0 0
        %882 = vmatprep.subr.bf16.mxu0 0
        %883 = vmatpush1.bf16.xpose.msra.mxu0 0
        %884 = vmatprep.subr.bf16.mxu0 0
        %885 = vmatpush1.bf16.xpose.msra.mxu0 0
        %886 = vmatprep.subr.bf16.mxu0 0
        %887 = vmatpush1.bf16.xpose.msra.mxu0 0
        %888 = vmatprep.subr.bf16.mxu0 0
        %889 = vmatpush1.bf16.xpose.msra.mxu0 0
        %890 = vmatprep.subr.bf16.mxu0 0
        %891 = vmatpush1.bf16.xpose.msra.mxu0 0
        %892 = vmatprep.subr.bf16.mxu0 0
        %893 = vmatpush1.bf16.xpose.msra.mxu0 0
        %894 = vmatprep.subr.bf16.mxu0 0
        %895 = vmatpush1.bf16.xpose.msra.mxu0 0
        %896 = vmatprep.subr.bf16.mxu0 0
        %897 = vmatpush1.bf16.xpose.msra.mxu0 0
        %898 = vmatprep.mubr.bf16.mxu0 0
        %899 = vmatmul.mubr.bf16.gmra.mrb[0].mxu0 %v861
        %v900 = vpop.f32.mrb[0].mxu0
        %v901 = vadd.f32 0.0, %v900
        %v902 = vpop.f32.mrb[0].mxu0
        %v903 = vpop.f32.mrb[0].mxu0
        %v904 = vpop.f32.mrb[0].mxu0
        %905 = vdwg.mxu0
        %v906 = vmul.f32 %v901, 0.35355338
        %v907 = vsel %vm525, %v906, -inf
        %908 = vmax.xlane.f32.xlu0 %v907
        %v909 = vpop.xlane.xlu0 %908
        %v910 = vsub.f32 %v906, %v909
        %v911 = vmul.f32 %v910, 1.442695
        %v912 = vpow.pop %v911
        %v913 = vsel %vm525, %v912, 0.0
        %914 = vadd.xlane.f32.xlu0 %v913
        %v915 = vpop.xlane.xlu0 %914
        %v916 = vrcp.pop %v915
        %v917 = vmul.f32 %v912, %v916
        %v918 = vpack.c.bf16 %v917, %v917
        %919 = vrot.lane.b32.xlu0 %v521, 40
        %v920 = vpop.permute.xlu0 %919
        %v922 = vsel %vm525, %v918, 0
        %v925 = vsel %vm590, %v920, 0
        %927 = vmatprep.subr.bf16.mxu0 0
        %928 = vmatpush1.bf16.msra.mxu0 %v925
        %929 = vmatprep.subr.bf16.mxu0 0
        %930 = vmatpush1.bf16.msra.mxu0 0
        %931 = vmatprep.subr.bf16.mxu0 0
        %932 = vmatpush1.bf16.msra.mxu0 0
        %933 = vmatprep.subr.bf16.mxu0 0
        %934 = vmatpush1.bf16.msra.mxu0 0
        %935 = vmatprep.subr.bf16.mxu0 0
        %936 = vmatpush1.bf16.msra.mxu0 0
        %937 = vmatprep.subr.bf16.mxu0 0
        %938 = vmatpush1.bf16.msra.mxu0 0
        %939 = vmatprep.subr.bf16.mxu0 0
        %940 = vmatpush1.bf16.msra.mxu0 0
        %941 = vmatprep.subr.bf16.mxu0 0
        %942 = vmatpush1.bf16.msra.mxu0 0
        %943 = vmatprep.subr.bf16.mxu0 0
        %944 = vmatpush1.bf16.msra.mxu0 0
        %945 = vmatprep.subr.bf16.mxu0 0
        %946 = vmatpush1.bf16.msra.mxu0 0
        %947 = vmatprep.subr.bf16.mxu0 0
        %948 = vmatpush1.bf16.msra.mxu0 0
        %949 = vmatprep.subr.bf16.mxu0 0
        %950 = vmatpush1.bf16.msra.mxu0 0
        %951 = vmatprep.subr.bf16.mxu0 0
        %952 = vmatpush1.bf16.msra.mxu0 0
        %953 = vmatprep.subr.bf16.mxu0 0
        %954 = vmatpush1.bf16.msra.mxu0 0
        %955 = vmatprep.subr.bf16.mxu0 0
        %956 = vmatpush1.bf16.msra.mxu0 0
        %957 = vmatprep.subr.bf16.mxu0 0
        %958 = vmatpush1.bf16.msra.mxu0 0
        %959 = vmatprep.mubr.bf16.mxu0 0
        %960 = vmatmul.mubr.bf16.gmra.mrb[0].mxu0 %v922
        %v961 = vpop.f32.mrb[0].mxu0
        %v962 = vadd.f32 0.0, %v961
        %v963 = vpop.f32.mrb[0].mxu0
        %v964 = vpop.f32.mrb[0].mxu0
        %v965 = vpop.f32.mrb[0].mxu0
        %966 = vdwg.mxu0
        %968 = vrot.lane.b32.xlu0 %v740, 8
        %v969 = vpop.permute.xlu0 %968
        %972 = vrot.lane.b32.xlu0 %v851, 16
        %v973 = vpop.permute.xlu0 %972
        %976 = vrot.lane.b32.xlu0 %v962, 24
        %v977 = vpop.permute.xlu0 %976
        %v979 = vsel %vm525, %v629, %v969
        %vm980 = vcmask 130048
        %v981 = vsel %vm980, %v979, %v973
        %vm982 = vcmask 195584
        %v983 = vsel %vm982, %v981, %v977
        %v984 = vpack.c.bf16 %v983, %v983
        %v985 = vld [vmem:[%s3] sm:$0xf]
        %v986 = vld [vmem:[%s3 + $0x4] sm:$0xf]
        %v987 = vld [vmem:[%s3 + $0x8] sm:$0xf]
        %v988 = vld [vmem:[%s3 + $0xc] sm:$0xf]
        %v989 = vld [vmem:[%s4] sm:$0x1]
        %v991 = vlaneseq
        %v992 = vshrl.u32 %v991, 7
        %v993 = vsub.s32 0, %v992
        %v994 = vrot.slane %v989, %v993
        %v1000 = vunpack.c.l.b16 %v985
        %v1001 = vunpack.c.l.b16 %v986
        %v1002 = vunpack.c.l.b16 %v987
        %v1003 = vunpack.c.l.b16 %v988
        %v1004 = vpack.c.b16 %v1001, %v1000
        %v1005 = vpack.c.b16 %v1003, %v1002
        %v1009 = vsel %vm477, %v984, 0
        %1011 = vmatprep.subr.bf16.mxu0 0
        %1012 = vmatpush1.bf16.msra.mxu0 %v1004
        %1013 = vmatprep.subr.bf16.mxu0 0
        %1014 = vmatpush1.bf16.msra.mxu0 %v1005
        %1015 = vmatprep.subr.bf16.mxu0 0
        %1016 = vmatpush1.bf16.msra.mxu0 0
        %1017 = vmatprep.subr.bf16.mxu0 0
        %1018 = vmatpush1.bf16.msra.mxu0 0
        %1019 = vmatprep.subr.bf16.mxu0 0
        %1020 = vmatpush1.bf16.msra.mxu0 0
        %1021 = vmatprep.subr.bf16.mxu0 0
        %1022 = vmatpush1.bf16.msra.mxu0 0
        %1023 = vmatprep.subr.bf16.mxu0 0
        %1024 = vmatpush1.bf16.msra.mxu0 0
        %1025 = vmatprep.subr.bf16.mxu0 0
        %1026 = vmatpush1.bf16.msra.mxu0 0
        %1027 = vmatprep.subr.bf16.mxu0 0
        %1028 = vmatpush1.bf16.msra.mxu0 0
        %1029 = vmatprep.subr.bf16.mxu0 0
        %1030 = vmatpush1.bf16.msra.mxu0 0
        %1031 = vmatprep.subr.bf16.mxu0 0
        %1032 = vmatpush1.bf16.msra.mxu0 0
        %1033 = vmatprep.subr.bf16.mxu0 0
        %1034 = vmatpush1.bf16.msra.mxu0 0
        %1035 = vmatprep.subr.bf16.mxu0 0
        %1036 = vmatpush1.bf16.msra.mxu0 0
        %1037 = vmatprep.subr.bf16.mxu0 0
        %1038 = vmatpush1.bf16.msra.mxu0 0
        %1039 = vmatprep.subr.bf16.mxu0 0
        %1040 = vmatpush1.bf16.msra.mxu0 0
        %1041 = vmatprep.subr.bf16.mxu0 0
        %1042 = vmatpush1.bf16.msra.mxu0 0
        %1043 = vmatprep.mubr.bf16.mxu0 0
        %1044 = vmatmul.mubr.bf16.gmra.mrb[0].mxu0 %v1009
        %v1045 = vpop.f32.mrb[0].mxu0
        %v1046 = vadd.f32 %v994, %v1045
        %v1047 = vpop.f32.mrb[0].mxu0
        %v1048 = vpop.f32.mrb[0].mxu0
        %v1049 = vpop.f32.mrb[0].mxu0
        %1050 = vdwg.mxu0
        %v1051 = vadd.f32 %v452, %v1046
        %v1052 = vsel %vm477, %v1051, 0.0
        %1053 = vadd.xlane.f32.xlu0 %v1052
        %v1054 = vpop.xlane.xlu0 %1053
        %v1055 = vrcp.pop 32.0
        %v1056 = vmul.f32 %v1054, %v1055
        %v1057 = vsub.f32 %v1051, %v1056
        %v1058 = vmul.f32 %v1057, %v1057
        %v1059 = vsel %vm477, %v1058, 0.0
        %1060 = vadd.xlane.f32.xlu0 %v1059
        %v1061 = vpop.xlane.xlu0 %1060
        %v1062 = vmul.f32 %v1061, %v1055
        %v1063 = vadd.f32 %v1062, 1e-05
        %v1064 = vrsqrt.pop %v1063
        %v1065 = vmul.f32 %v1057, %v1064
        %v1066 = vld [vmem:[%s5] sm:$0x1]
        %v1068 = vlaneseq
        %v1069 = vshrl.u32 %v1068, 7
        %v1070 = vsub.s32 0, %v1069
        %v1071 = vrot.slane %v1066, %v1070
        %v1073 = vmul.f32 %v1065, %v1071
        %v1074 = vld [vmem:[%s6] sm:$0x1]
        %v1076 = vlaneseq
        %v1077 = vshrl.u32 %v1076, 7
        %v1078 = vsub.s32 0, %v1077
        %v1079 = vrot.slane %v1074, %v1078
        %v1081 = vadd.f32 %v1073, %v1079
        %v1082 = vpack.c.bf16 %v1081, %v1081
        %v1083 = vld [vmem:[#allocation2] sm:$0xf]
        %v1084 = vld [vmem:[#allocation2 + $0x4] sm:$0xf]
        %v1085 = vld [vmem:[#allocation2 + $0x8] sm:$0xf]
        %v1086 = vld [vmem:[#allocation2 + $0xc] sm:$0xf]
        %v1087 = vld [vmem:[%s8] sm:$0x1]
        %v1089 = vlaneseq
        %v1090 = vshrl.u32 %v1089, 7
        %v1091 = vsub.s32 0, %v1090
        %v1092 = vrot.slane %v1087, %v1091
        %v1098 = vunpack.c.l.b16 %v1083
        %v1099 = vunpack.c.l.b16 %v1084
        %v1100 = vunpack.c.l.b16 %v1085
        %v1101 = vunpack.c.l.b16 %v1086
        %v1102 = vpack.c.b16 %v1099, %v1098
        %v1103 = vpack.c.b16 %v1101, %v1100
        %v1107 = vsel %vm477, %v1082, 0
        %1109 = vmatprep.subr.bf16.mxu0 0
        %1110 = vmatpush1.bf16.msra.mxu0 %v1102
        %1111 = vmatprep.subr.bf16.mxu0 0
        %1112 = vmatpush1.bf16.msra.mxu0 %v1103
        %1113 = vmatprep.subr.bf16.mxu0 0
        %1114 = vmatpush1.bf16.msra.mxu0 0
        %1115 = vmatprep.subr.bf16.mxu0 0
        %1116 = vmatpush1.bf16.msra.mxu0 0
        %1117 = vmatprep.subr.bf16.mxu0 0
        %1118 = vmatpush1.bf16.msra.mxu0 0
        %1119 = vmatprep.subr.bf16.mxu0 0
        %1120 = vmatpush1.bf16.msra.mxu0 0
        %1121 = vmatprep.subr.bf16.mxu0 0
        %1122 = vmatpush1.bf16.msra.mxu0 0
        %1123 = vmatprep.subr.bf16.mxu0 0
        %1124 = vmatpush1.bf16.msra.mxu0 0
        %1125 = vmatprep.subr.bf16.mxu0 0
        %1126 = vmatpush1.bf16.msra.mxu0 0
        %1127 = vmatprep.subr.bf16.mxu0 0
        %1128 = vmatpush1.bf16.msra.mxu0 0
        %1129 = vmatprep.subr.bf16.mxu0 0
        %1130 = vmatpush1.bf16.msra.mxu0 0
        %1131 = vmatprep.subr.bf16.mxu0 0
        %1132 = vmatpush1.bf16.msra.mxu0 0
        %1133 = vmatprep.subr.bf16.mxu0 0
        %1134 = vmatpush1.bf16.msra.mxu0 0
        %1135 = vmatprep.subr.bf16.mxu0 0
        %1136 = vmatpush1.bf16.msra.mxu0 0
        %1137 = vmatprep.subr.bf16.mxu0 0
        %1138 = vmatpush1.bf16.msra.mxu0 0
        %1139 = vmatprep.subr.bf16.mxu0 0
        %1140 = vmatpush1.bf16.msra.mxu0 0
        %1141 = vmatprep.mubr.bf16.mxu0 0
        %1142 = vmatmul.mubr.bf16.gmra.mrb[0].mxu0 %v1107
        %v1143 = vpop.f32.mrb[0].mxu0
        %v1144 = vadd.f32 %v1092, %v1143
        %v1145 = vpop.f32.mrb[0].mxu0
        %v1146 = vpop.f32.mrb[0].mxu0
        %v1147 = vpop.f32.mrb[0].mxu0
        %1148 = vdwg.mxu0
        %v1149 = vmax.f32 %v1144, 0.0
        %v1150 = vpack.c.bf16 %v1149, %v1149
        %v1151 = vld [vmem:[%s9] sm:$0xf]
        %v1152 = vld [vmem:[%s9 + $0x4] sm:$0xf]
        %v1153 = vld [vmem:[%s9 + $0x8] sm:$0xf]
        %v1154 = vld [vmem:[%s9 + $0xc] sm:$0xf]
        %v1155 = vld [vmem:[%s9 + $0x10] sm:$0xf]
        %v1156 = vld [vmem:[%s9 + $0x14] sm:$0xf]
        %v1157 = vld [vmem:[%s9 + $0x18] sm:$0xf]
        %v1158 = vld [vmem:[%s9 + $0x1c] sm:$0xf]
        %v1159 = vld [vmem:[%s10] sm:$0x1]
        %v1161 = vlaneseq
        %v1162 = vshrl.u32 %v1161, 7
        %v1163 = vsub.s32 0, %v1162
        %v1164 = vrot.slane %v1159, %v1163
        %v1174 = vunpack.c.l.b16 %v1151
        %v1175 = vunpack.c.l.b16 %v1152
        %v1176 = vunpack.c.l.b16 %v1153
        %v1177 = vunpack.c.l.b16 %v1154
        %v1178 = vunpack.c.l.b16 %v1155
        %v1179 = vunpack.c.l.b16 %v1156
        %v1180 = vunpack.c.l.b16 %v1157
        %v1181 = vunpack.c.l.b16 %v1158
        %v1182 = vpack.c.b16 %v1175, %v1174
        %v1183 = vpack.c.b16 %v1177, %v1176
        %v1184 = vpack.c.b16 %v1179, %v1178
        %v1185 = vpack.c.b16 %v1181, %v1180
        %vm1190 = vcmask 523264
        %v1192 = vsel %vm1190, %v1150, 0
        %1194 = vmatprep.subr.bf16.mxu0 0
        %1195 = vmatpush1.bf16.msra.mxu0 %v1182
        %1196 = vmatprep.subr.bf16.mxu0 0
        %1197 = vmatpush1.bf16.msra.mxu0 %v1183
        %1198 = vmatprep.subr.bf16.mxu0 0
        %1199 = vmatpush1.bf16.msra.mxu0 %v1184
        %1200 = vmatprep.subr.bf16.mxu0 0
        %1201 = vmatpush1.bf16.msra.mxu0 %v1185
        %1202 = vmatprep.subr.bf16.mxu0 0
        %1203 = vmatpush1.bf16.msra.mxu0 0
        %1204 = vmatprep.subr.bf16.mxu0 0
        %1205 = vmatpush1.bf16.msra.mxu0 0
        %1206 = vmatprep.subr.bf16.mxu0 0
        %1207 = vmatpush1.bf16.msra.mxu0 0
        %1208 = vmatprep.subr.bf16.mxu0 0
        %1209 = vmatpush1.bf16.msra.mxu0 0
        %1210 = vmatprep.subr.bf16.mxu0 0
        %1211 = vmatpush1.bf16.msra.mxu0 0
        %1212 = vmatprep.subr.bf16.mxu0 0
        %1213 = vmatpush1.bf16.msra.mxu0 0
        %1214 = vmatprep.subr.bf16.mxu0 0
        %1215 = vmatpush1.bf16.msra.mxu0 0
        %1216 = vmatprep.subr.bf16.mxu0 0
        %1217 = vmatpush1.bf16.msra.mxu0 0
        %1218 = vmatprep.subr.bf16.mxu0 0
        %1219 = vmatpush1.bf16.msra.mxu0 0
        %1220 = vmatprep.subr.bf16.mxu0 0
        %1221 = vmatpush1.bf16.msra.mxu0 0
        %1222 = vmatprep.subr.bf16.mxu0 0
        %1223 = vmatpush1.bf16.msra.mxu0 0
        %1224 = vmatprep.subr.bf16.mxu0 0
        %1225 = vmatpush1.bf16.msra.mxu0 0
        %1226 = vmatprep.mubr.bf16.mxu0 0
        %1227 = vmatmul.mubr.bf16.gmra.mrb[0].mxu0 %v1192
        %v1228 = vpop.f32.mrb[0].mxu0
        %v1229 = vadd.f32 %v1164, %v1228
        %v1230 = vpop.f32.mrb[0].mxu0
        %v1231 = vpop.f32.mrb[0].mxu0
        %v1232 = vpop.f32.mrb[0].mxu0
        %1233 = vdwg.mxu0
        %v1234 = vadd.f32 %v1081, %v1229
        %v1235 = vsel %vm477, %v1234, 0.0
        %1236 = vadd.xlane.f32.xlu0 %v1235
        %v1237 = vpop.xlane.xlu0 %1236
        %v1238 = vmul.f32 %v1237, %v1055
        %v1239 = vsub.f32 %v1234, %v1238
        %v1240 = vmul.f32 %v1239, %v1239
        %v1241 = vsel %vm477, %v1240, 0.0
        %1242 = vadd.xlane.f32.xlu0 %v1241
        %v1243 = vpop.xlane.xlu0 %1242
        %v1244 = vmul.f32 %v1243, %v1055
        %v1245 = vadd.f32 %v1244, 1e-05
        %v1246 = vrsqrt.pop %v1245
        %v1247 = vmul.f32 %v1239, %v1246
        %v1248 = vld [vmem:[%s11] sm:$0x1]
        %v1250 = vlaneseq
        %v1251 = vshrl.u32 %v1250, 7
        %v1252 = vsub.s32 0, %v1251
        %v1253 = vrot.slane %v1248, %v1252
        %v1255 = vmul.f32 %v1247, %v1253
        %v1256 = vld [vmem:[%s12] sm:$0x1]
        %v1258 = vlaneseq
        %v1259 = vshrl.u32 %v1258, 7
        %v1260 = vsub.s32 0, %v1259
        %v1261 = vrot.slane %v1256, %v1260
        %v1263 = vadd.f32 %v1255, %v1261
        %1264 = vst.msk [vmem:[%s446] sm:$0xff] %vm477, %v1263
        %s1265 = sand.u32 %s314, 1
        %s1266 = scalar_lea.sflag [#allocation4], %s1265
        %s1267 = sand.u32 %s314, 1
        %s1268 = smul.addr %s1267, 8
        %s1269 = scalar_lea.vmem [#allocation5], %s1268
        // Predicated region
        $region77: #{tpu_custom_call.1} parent=71 // pred_check
          %p1270 = pneg %p324
        $region78: #{tpu_custom_call.1} parent=71 // pred_check_branch
          %1272 = sbr.rel (%p1270) target = $region80
        $region79: #{tpu_custom_call.1} parent=71 // pred_region
          %s1274 = ssub.s32 128, 128
          %1275 = vsyncadd %s1266, %s1274
          %s1276 = smul.addr %s28, 128
          %s1277 = scalar_lea.hbm %s13, %s1276
          %s1279 = sshll.u32 %s1269, 4
          %s1280 = int_to_ptr.vmem [resolvable:$true] %s1279
          %1282 = dma.vmem_to_hbm [thread:$0]  %s1280, 128, %s1277, %s1266
        $region80: #{tpu_custom_call.1} parent=71 // pred_fallthru
          _
      $region72: #{tpu_custom_call.1} parent=5 // pred_fallthru
        _
      %p1283 = scmp.le.s32.totalorder 2, %s23
      // Predicated region
      $region81: #{tpu_custom_call.1} parent=5 // pred_check
        %p1284 = pneg %p1283
      $region82: #{tpu_custom_call.1} parent=5 // pred_check_branch
        %1286 = sbr.rel (%p1284) target = $region84
      $region83: #{tpu_custom_call.1} parent=5 // pred_region
        %s1287 = ssub.s32 %s23, 2
        // Predicated region
        $region85: #{tpu_custom_call.1} parent=83 // pred_check
          %p1288 = pneg %p330
        $region86: #{tpu_custom_call.1} parent=83 // pred_check_branch
          %1290 = sbr.rel (%p1288) target = $region88
        $region87: #{tpu_custom_call.1} parent=83 // pred_region
          %s1291 = sand.u32 %s315, 1
          %s1292 = scalar_lea.sflag [#allocation4], %s1291
          %s1293 = sand.u32 %s315, 1
          %s1294 = smul.addr %s1293, 8
          %s1295 = scalar_lea.vmem [#allocation5], %s1294
          %1296 = dma.done %s1292, 128
        $region88: #{tpu_custom_call.1} parent=83 // pred_fallthru
          _
      $region84: #{tpu_custom_call.1} parent=5 // pred_fallthru
        _
    $region6: #{tpu_custom_call.1} parent=1 // loop_footer
      %s27 = sadd.s32 1, %s23
    $region7: #{tpu_custom_call.1} parent=1 // loop_footer_branch
      %22 = sbr.rel target = $region3
    $region8: #{tpu_custom_call.1} parent=1 // loop_exit
      _
    %1297 = vsyncpa [#allocation3], 1
    %s1298 = scalar_lea.sflag [#allocation3], 1
    %1299 = vsyncpa %s1298, 1
    %1300 = vsyncpa [#allocation4], 1
    %s1301 = scalar_lea.sflag [#allocation4], 1
    %1302 = vsyncpa %s1301, 1

</llo_original>
